<compile_context>
chip_gen: v6e
topology: v6e:2x2x1
jax: 0.10.0
libtpu: 0.0.40
codegen_flags: <defaults>
</compile_context>

<pallas_src>
import math

import numpy as np
import jax
import jax.numpy as jnp
from jax.experimental import pallas as pl
from jax.experimental.pallas import tpu as pltpu


def _gaussian_1d(window_size: int, sigma: float) -> np.ndarray:
    """Same as PyTorch gaussian(): normalized 1D gaussian, float32."""
    g = np.array(
        [math.exp(-((x - window_size // 2) ** 2) / float(2 * sigma ** 2))
         for x in range(window_size)],
        dtype=np.float64,
    )
    g = g / g.sum()
    return g.astype(np.float32)


def _banded_conv_matrix(n: int, g: np.ndarray) -> np.ndarray:
    """(n, n) banded matrix M with M[r, r+d] = g[d + pad] for |d| <= pad.

    M @ x is the 1D 'same' cross-correlation (F.conv2d semantics) of each
    column of x with g under implicit zero padding; x @ M does the rows
    (g is symmetric, so M is symmetric).
    """
    ws = g.shape[0]
    pad = ws // 2
    m = np.zeros((n, n), dtype=np.float32)
    for r in range(n):
        for d in range(-pad, pad + 1):
            rr = r + d
            if 0 <= rr < n:
                m[r, rr] = g[d + pad]
    return m


def _block_diag(mat: np.ndarray, n: int) -> np.ndarray:
    """Block-diagonal repetition of `mat` n times (keeps packed images apart)."""
    w = mat.shape[0]
    out = np.zeros((n * w, n * w), dtype=mat.dtype)
    for j in range(n):
        out[j * w:(j + 1) * w, j * w:(j + 1) * w] = mat
    return out


_C1 = 0.01 ** 2
_C2 = 0.03 ** 2


def _ssim_kernel(x1_ref, x2_ref, av_ref, bh_ref, out_ref):
    x1 = x1_ref[...].astype(jnp.float32)   # (H, PW) packed images, slab 1
    x2 = x2_ref[...].astype(jnp.float32)   # (H, PW) packed images, slab 2
    a_v = av_ref[...]                      # (H, H) vertical banded Gaussian
    b_h = bh_ref[...]                      # (PW, PW) block-diag horizontal Gaussian
    h, pw = x1.shape

    # --- fused separable Gaussian blur of all 5 operands (2 MXU matmuls) ---
    # Vertical pass: operands concatenated along lanes -> single (H,H)@(H,5PW).
    xs = jnp.concatenate([x1, x2, x1 * x1, x2 * x2, x1 * x2], axis=1)  # (H, 5PW)
    t = jnp.dot(a_v, xs, preferred_element_type=jnp.float32,
                precision=jax.lax.Precision.HIGHEST)                   # (H, 5PW)
    # Restack the 5 chunks along rows, then a single (5H,PW)@(PW,PW) matmul.
    t_rows = jnp.concatenate([t[:, k * pw:(k + 1) * pw] for k in range(5)],
                             axis=0)                                    # (5H, PW)
    gb = jnp.dot(t_rows, b_h, preferred_element_type=jnp.float32,
                 precision=jax.lax.Precision.HIGHEST)                   # (5H, PW)

    mu1 = gb[0:h]
    mu2 = gb[h:2 * h]
    e11 = gb[2 * h:3 * h]
    e22 = gb[3 * h:4 * h]
    e12 = gb[4 * h:5 * h]

    mu1_sq = mu1 * mu1
    mu2_sq = mu2 * mu2
    mu1_mu2 = mu1 * mu2
    sigma1_sq = e11 - mu1_sq
    sigma2_sq = e22 - mu2_sq
    sigma12 = e12 - mu1_mu2

    ssim_map = ((2.0 * mu1_mu2 + _C1) * (2.0 * sigma12 + _C2)) / (
        (mu1_sq + mu2_sq + _C1) * (sigma1_sq + sigma2_sq + _C2))

    # Lane-dense per-column partial sums; per-image / global reduction is in
    # the wrapper (padded image slots are simply dropped there).
    out_ref[...] = jnp.sum(ssim_map, axis=0, keepdims=True)   # (1, PW)


def ssim(img1, img2, window_size=11, sigma=1.5, size_average=True,
         lanes_target=256):
    assert img1.shape == img2.shape
    B, C, H, W = img1.shape
    BC = B * C

    # How many (b, c) images to pack side by side along lanes per grid step.
    n_pack = max(1, min(BC, lanes_target // W))
    steps = -(-BC // n_pack)
    # v7x has 2 TensorCores: keep >= 2 parallel grid steps when we can do so
    # without dropping below 128 packed lanes.
    if steps == 1 and BC >= 2 and (-(-BC // 2)) * W >= 128:
        n_pack = -(-BC // 2)
        steps = 2
    PW = n_pack * W

    g = _gaussian_1d(window_size, sigma)
    a_v = jnp.asarray(_banded_conv_matrix(H, g))                    # (H, H)
    b_h = jnp.asarray(_block_diag(_banded_conv_matrix(W, g), n_pack))  # (PW, PW)

    def pack(x):
        # (B,C,H,W) -> (steps, H, n_pack*W), images side by side along lanes.
        xf = x.reshape(BC, H, W)
        pad_n = steps * n_pack - BC
        if pad_n:
            xf = jnp.concatenate(
                [xf, jnp.zeros((pad_n, H, W), xf.dtype)], axis=0)
        return (xf.reshape(steps, n_pack, H, W)
                  .transpose(0, 2, 1, 3)
                  .reshape(steps, H, PW))

    # Keep native dtype through packing; the kernel casts to f32 after load.
    x1p = pack(img1)
    x2p = pack(img2)

    in_bytes = (x1p.size * x1p.dtype.itemsize + x2p.size * x2p.dtype.itemsize
                + (H * H + PW * PW) * 4)
    out_bytes = steps * PW * 4
    flops = steps * (2 * H * H * 5 * PW + 2 * 5 * H * PW * PW + 20 * H * PW)
    cost = pl.CostEstimate(flops=flops, transcendentals=0,
                           bytes_accessed=in_bytes + out_bytes)

    colsum = pl.pallas_call(
        _ssim_kernel,
        out_shape=jax.ShapeDtypeStruct((steps, PW), jnp.float32),
        grid=(steps,),
        in_specs=[
            pl.BlockSpec((None, H, PW), lambda s: (s, 0, 0)),
            pl.BlockSpec((None, H, PW), lambda s: (s, 0, 0)),
            # Constant block index -> banded matrices DMA'd once, VMEM-resident.
            pl.BlockSpec((H, H), lambda s: (0, 0)),
            pl.BlockSpec((PW, PW), lambda s: (0, 0)),
        ],
        out_specs=pl.BlockSpec((1, PW), lambda s: (s, 0)),
        compiler_params=pltpu.CompilerParams(
            dimension_semantics=("parallel",)),
        cost_estimate=cost,
    )(x1p, x2p, a_v, b_h)

    # (steps, n_pack*W) -> per-image sums; drop padded slots.
    per_img = jnp.sum(colsum.reshape(steps * n_pack, W), axis=-1)[:BC]
    sums = per_img.reshape(B, C)
    if size_average:
        return jnp.sum(sums) / (B * C * H * W)
    # size_average=False: per-sample mean over (C, H, W), like
    # ssim_map.mean(1).mean(1).mean(1) in the PyTorch module.
    return jnp.sum(sums, axis=1) / (C * H * W)


def _ssim_ref_map(img1, img2, window_size=11, sigma=1.5):
    """Pure-JAX reference (lax depthwise conv); returns the full ssim map."""
    B, C, H, W = img1.shape
    pad = window_size // 2
    g = jnp.asarray(_gaussian_1d(window_size, sigma))
    w2d = jnp.outer(g, g)
    w = jnp.broadcast_to(w2d[None, None], (C, 1, window_size, window_size))

    def conv(x):
        return jax.lax.conv_general_dilated(
            x, w, window_strides=(1, 1), padding=[(pad, pad), (pad, pad)],
            feature_group_count=C, precision=jax.lax.Precision.HIGHEST)

    mu1 = conv(img1)
    mu2 = conv(img2)
    mu1_sq, mu2_sq, mu1_mu2 = mu1 * mu1, mu2 * mu2, mu1 * mu2
    sigma1_sq = conv(img1 * img1) - mu1_sq
    sigma2_sq = conv(img2 * img2) - mu2_sq
    sigma12 = conv(img1 * img2) - mu1_mu2
    return ((2 * mu1_mu2 + _C1) * (2 * sigma12 + _C2)) / (
        (mu1_sq + mu2_sq + _C1) * (sigma1_sq + sigma2_sq + _C2))


if __name__ == "__main__":
    key = jax.random.PRNGKey(0)
    k1, k2 = jax.random.split(key)
    img1 = jax.random.uniform(k1, (2, 4, 16, 16), dtype=jnp.float32)
    img2 = jax.random.uniform(k2, (2, 4, 16, 16), dtype=jnp.float32)

    out_mean = jax.block_until_ready(ssim(img1, img2))
    out_per_sample = jax.block_until_ready(ssim(img1, img2, size_average=False))

    ref_map = jax.block_until_ready(_ssim_ref_map(img1, img2))
    ref_mean = np.asarray(ref_map).mean()
    ref_per_sample = np.asarray(ref_map).mean(axis=(1, 2, 3))

    np.testing.assert_allclose(np.asarray(out_mean), ref_mean,
                               rtol=1e-4, atol=1e-5)
    np.testing.assert_allclose(np.asarray(out_per_sample), ref_per_sample,
                               rtol=1e-4, atol=1e-5)

    print("KERNEL_OK")
</pallas_src>

<mosaic_0001>
module attributes {stable_mosaic.version = 11 : i64} {
  func.func @_ssim_kernel(%arg0: i32, %arg1: memref<1x16x128xf32, #tpu.memory_space<vmem>>, %arg2: memref<1x16x128xf32, #tpu.memory_space<vmem>>, %arg3: memref<16x16xf32, #tpu.memory_space<vmem>>, %arg4: memref<128x128xf32, #tpu.memory_space<vmem>>, %arg5: memref<1x128xf32, #tpu.memory_space<vmem>>) attributes {dimension_semantics = [#tpu.dimension_semantics<parallel>], iteration_bounds = array<i64: 1>, scalar_prefetch = 0 : i64, scratch_operands = 0 : i64, tpu.core_type = #tpu.core_type<tc>, window_params = [{transform_indices = @transform_0, window_bounds = array<i64: 1, 16, 128>}, {transform_indices = @transform_1, window_bounds = array<i64: 1, 16, 128>}, {pipeline_mode = #tpu.pipeline_mode<synchronous>, transform_indices = @transform_2, window_bounds = array<i64: 16, 16>}, {pipeline_mode = #tpu.pipeline_mode<synchronous>, transform_indices = @transform_3, window_bounds = array<i64: 128, 128>}, {transform_indices = @transform_4, window_bounds = array<i64: 1, 128>}]} {
    %c0 = arith.constant 0 : index
    %c0_0 = arith.constant 0 : index
    %c0_1 = arith.constant 0 : index
    %0 = vector.load %arg1[%c0, %c0_0, %c0_1] : memref<1x16x128xf32, #tpu.memory_space<vmem>>, vector<1x16x128xf32>
    %1 = vector.shape_cast %0 : vector<1x16x128xf32> to vector<16x128xf32>
    %c0_2 = arith.constant 0 : index
    %c0_3 = arith.constant 0 : index
    %c0_4 = arith.constant 0 : index
    %2 = vector.load %arg2[%c0_2, %c0_3, %c0_4] : memref<1x16x128xf32, #tpu.memory_space<vmem>>, vector<1x16x128xf32>
    %3 = vector.shape_cast %2 : vector<1x16x128xf32> to vector<16x128xf32>
    %c0_5 = arith.constant 0 : index
    %c0_6 = arith.constant 0 : index
    %4 = vector.load %arg3[%c0_5, %c0_6] : memref<16x16xf32, #tpu.memory_space<vmem>>, vector<16x16xf32>
    %c0_7 = arith.constant 0 : index
    %c0_8 = arith.constant 0 : index
    %5 = vector.load %arg4[%c0_7, %c0_8] : memref<128x128xf32, #tpu.memory_space<vmem>>, vector<128x128xf32>
    %6 = arith.mulf %1, %1 : vector<16x128xf32>
    %7 = arith.mulf %3, %3 : vector<16x128xf32>
    %8 = arith.mulf %1, %3 : vector<16x128xf32>
    %9 = tpu.concatenate %1, %3, %6, %7, %8 in 1 : vector<16x128xf32>, vector<16x128xf32>, vector<16x128xf32>, vector<16x128xf32>, vector<16x128xf32> -> vector<16x640xf32>
    %cst = arith.constant dense<0.000000e+00> : vector<16x640xf32>
    %10 = tpu.matmul %4, %9, %cst {dimension_numbers = #tpu.dot_dimension_numbers<[1], [0], [0], [1], [0, 0, 1, 1], [], []>, precision = #tpu.contract_precision<fp32>} : vector<16x16xf32>, vector<16x640xf32>, vector<16x640xf32> -> vector<16x640xf32>
    %11 = vector.extract_strided_slice %10 {offsets = [0, 0], sizes = [16, 128], strides = [1, 1]} : vector<16x640xf32> to vector<16x128xf32>
    %12 = vector.extract_strided_slice %10 {offsets = [0, 128], sizes = [16, 128], strides = [1, 1]} : vector<16x640xf32> to vector<16x128xf32>
    %13 = vector.extract_strided_slice %10 {offsets = [0, 256], sizes = [16, 128], strides = [1, 1]} : vector<16x640xf32> to vector<16x128xf32>
    %14 = vector.extract_strided_slice %10 {offsets = [0, 384], sizes = [16, 128], strides = [1, 1]} : vector<16x640xf32> to vector<16x128xf32>
    %15 = vector.extract_strided_slice %10 {offsets = [0, 512], sizes = [16, 128], strides = [1, 1]} : vector<16x640xf32> to vector<16x128xf32>
    %16 = tpu.concatenate %11, %12, %13, %14, %15 in 0 : vector<16x128xf32>, vector<16x128xf32>, vector<16x128xf32>, vector<16x128xf32>, vector<16x128xf32> -> vector<80x128xf32>
    %cst_9 = arith.constant dense<0.000000e+00> : vector<80x128xf32>
    %17 = tpu.matmul %16, %5, %cst_9 {dimension_numbers = #tpu.dot_dimension_numbers<[1], [0], [0], [1], [0, 0, 1, 1], [], []>, precision = #tpu.contract_precision<fp32>} : vector<80x128xf32>, vector<128x128xf32>, vector<80x128xf32> -> vector<80x128xf32>
    %18 = vector.extract_strided_slice %17 {offsets = [0, 0], sizes = [16, 128], strides = [1, 1]} : vector<80x128xf32> to vector<16x128xf32>
    %19 = vector.extract_strided_slice %17 {offsets = [16, 0], sizes = [16, 128], strides = [1, 1]} : vector<80x128xf32> to vector<16x128xf32>
    %20 = vector.extract_strided_slice %17 {offsets = [32, 0], sizes = [16, 128], strides = [1, 1]} : vector<80x128xf32> to vector<16x128xf32>
    %21 = vector.extract_strided_slice %17 {offsets = [48, 0], sizes = [16, 128], strides = [1, 1]} : vector<80x128xf32> to vector<16x128xf32>
    %22 = vector.extract_strided_slice %17 {offsets = [64, 0], sizes = [16, 128], strides = [1, 1]} : vector<80x128xf32> to vector<16x128xf32>
    %23 = arith.mulf %18, %18 : vector<16x128xf32>
    %24 = arith.mulf %19, %19 : vector<16x128xf32>
    %25 = arith.mulf %18, %19 : vector<16x128xf32>
    %26 = arith.subf %20, %23 : vector<16x128xf32>
    %27 = arith.subf %21, %24 : vector<16x128xf32>
    %28 = arith.subf %22, %25 : vector<16x128xf32>
    %cst_10 = arith.constant 2.000000e+00 : f32
    %29 = vector.broadcast %cst_10 : f32 to vector<16x128xf32>
    %30 = arith.mulf %29, %25 : vector<16x128xf32>
    %cst_11 = arith.constant 9.99999974E-5 : f32
    %31 = vector.broadcast %cst_11 : f32 to vector<16x128xf32>
    %32 = arith.addf %30, %31 : vector<16x128xf32>
    %cst_12 = arith.constant 2.000000e+00 : f32
    %33 = vector.broadcast %cst_12 : f32 to vector<16x128xf32>
    %34 = arith.mulf %33, %28 : vector<16x128xf32>
    %cst_13 = arith.constant 8.99999984E-4 : f32
    %35 = vector.broadcast %cst_13 : f32 to vector<16x128xf32>
    %36 = arith.addf %34, %35 : vector<16x128xf32>
    %37 = arith.mulf %32, %36 : vector<16x128xf32>
    %38 = arith.addf %23, %24 : vector<16x128xf32>
    %cst_14 = arith.constant 9.99999974E-5 : f32
    %39 = vector.broadcast %cst_14 : f32 to vector<16x128xf32>
    %40 = arith.addf %38, %39 : vector<16x128xf32>
    %41 = arith.addf %26, %27 : vector<16x128xf32>
    %cst_15 = arith.constant 8.99999984E-4 : f32
    %42 = vector.broadcast %cst_15 : f32 to vector<16x128xf32>
    %43 = arith.addf %41, %42 : vector<16x128xf32>
    %44 = arith.mulf %40, %43 : vector<16x128xf32>
    %45 = arith.divf %37, %44 : vector<16x128xf32>
    %cst_16 = arith.constant dense<0.000000e+00> : vector<128xf32>
    %46 = vector.multi_reduction <add>, %45, %cst_16 [0] : vector<16x128xf32> to vector<128xf32>
    %47 = vector.shape_cast %46 : vector<128xf32> to vector<1x128xf32>
    %c0_17 = arith.constant 0 : index
    %c0_18 = arith.constant 0 : index
    %48 = vector.load %arg5[%c0_17, %c0_18] : memref<1x128xf32, #tpu.memory_space<vmem>>, vector<1x128xf32>
    tpu.vector_store %arg5[%c0_17, %c0_18], %47 {strides = array<i32>} : memref<1x128xf32, #tpu.memory_space<vmem>>, vector<1x128xf32>,
    return
  }
  func.func @transform_0(%arg0: i32) -> (i32, i32, i32) {
    %c0_i32 = arith.constant 0 : i32
    %c0_i32_0 = arith.constant 0 : i32
    %c0_i32_1 = arith.constant 0 : i32
    return %arg0, %c0_i32, %c0_i32_0 : i32, i32, i32
  }
  func.func @transform_1(%arg0: i32) -> (i32, i32, i32) {
    %c0_i32 = arith.constant 0 : i32
    %c0_i32_0 = arith.constant 0 : i32
    %c0_i32_1 = arith.constant 0 : i32
    return %arg0, %c0_i32, %c0_i32_0 : i32, i32, i32
  }
  func.func @transform_2(%arg0: i32) -> (i32, i32) {
    %c0_i32 = arith.constant 0 : i32
    %c0_i32_0 = arith.constant 0 : i32
    %c0_i32_1 = arith.constant 0 : i32
    return %c0_i32, %c0_i32_0 : i32, i32
  }
  func.func @transform_3(%arg0: i32) -> (i32, i32) {
    %c0_i32 = arith.constant 0 : i32
    %c0_i32_0 = arith.constant 0 : i32
    %c0_i32_1 = arith.constant 0 : i32
    return %c0_i32, %c0_i32_0 : i32, i32
  }
  func.func @transform_4(%arg0: i32) -> (i32, i32) {
    %c0_i32 = arith.constant 0 : i32
    %c0_i32_0 = arith.constant 0 : i32
    return %arg0, %c0_i32 : i32, i32
  }
}

</mosaic_0001>

<llo_original>
// kernel: tpu_custom_call.1
$region0: #{tpu_custom_call.1}
  #allocation0 [shape = 'u32[]', space=smem, size = 0x4, offset = 0x4, fixed_abs, tag = 'smem constant byte address 0x4 - core index']
  #allocation1 [shape = 'u32[144,128]{1,0:T(1,128)}', space=vmem, size = 0x12000, scoped, tag = 'internal scratch']
  %s0 = inlined_call_operand.hbm [shape: f32[1,16,128], index: 0, kind: input, shape index: {}]
  %s1 = inlined_call_operand.hbm [shape: f32[1,16,128], index: 1, kind: input, shape index: {}]
  %s2 = inlined_call_operand.hbm [shape: f32[16,16], index: 2, kind: input, shape index: {}]
  %s3 = inlined_call_operand.hbm [shape: f32[128,128], index: 3, kind: input, shape index: {}]
  %s4 = inlined_call_operand.hbm [shape: f32[1,128], index: 4, kind: output, shape index: {}]
  %s5 = sld [smem:[#allocation0]]
  $region42: #{tpu_custom_call.1} parent=0
    _
  %s7 = ssub.s32 1, %s5
  %s8 = scalar_select 0, %s7, %s5
  $region1: #{tpu_custom_call.1} parent=0
    #allocation2 [shape = 'u8[8192]{0}', space=vmem, size = 0x2000, scoped, tag = 'input window, operand 0, single buffered']
    #allocation3 [shape = 's32[1]{0}', space=sflag, size = 0x4, scoped, tag = 'scoped memory for tpu_custom_call.1']
    #allocation4 [shape = 's32[1]{0}', space=sflag, size = 0x4, scoped, tag = 'scoped memory for tpu_custom_call.1']
    #allocation5 [shape = 'u8[8192]{0}', space=vmem, size = 0x2000, scoped, tag = 'input window, operand 1, single buffered']
    #allocation6 [shape = 's32[1]{0}', space=sflag, size = 0x4, scoped, tag = 'scoped memory for tpu_custom_call.1']
    #allocation7 [shape = 'u8[8192]{0}', space=vmem, size = 0x2000, scoped, tag = 'input window, operand 2, single buffered']
    #allocation8 [shape = 'u8[65536]{0}', space=vmem, size = 0x10000, scoped, tag = 'input window, operand 3, single buffered']
    #allocation9 [shape = 's32[1]{0}', space=sflag, size = 0x4, scoped, tag = 'scoped memory for tpu_custom_call.1']
    #allocation10 [shape = 'u8[512]{0}', space=vmem, size = 0x400, scoped, tag = 'output window, operand 0, single buffered']
    %9 = vsyncpa [#allocation3], 0
    %10 = vsyncpa [#allocation6], 0
    %11 = vsyncpa [#allocation9], 0
    %12 = vsyncpa [#allocation4], 0
    // Predicated region
    $region2: #{tpu_custom_call.1} parent=1 // pred_check
      _
    $region3: #{tpu_custom_call.1} parent=1 // pred_check_branch
      %14 = sbr.rel (0) target = $region5
    $region4: #{tpu_custom_call.1} parent=1 // pred_region
      %s16 = ssub.s32 256, 256
      %17 = vsyncadd [#allocation3], %s16
      %s18 = sshll.u32 [#allocation2], 4
      %s19 = int_to_ptr.vmem [resolvable:$true] %s18
      %24 = dma.hbm_to_vmem [thread:$0]  %s0, 256, %s19, [#allocation3], 128, 128, 8
    $region5: #{tpu_custom_call.1} parent=1 // pred_fallthru
      _
    // Predicated region
    $region6: #{tpu_custom_call.1} parent=1 // pred_check
      _
    $region7: #{tpu_custom_call.1} parent=1 // pred_check_branch
      %26 = sbr.rel (0) target = $region9
    $region8: #{tpu_custom_call.1} parent=1 // pred_region
      %s28 = ssub.s32 256, 256
      %29 = vsyncadd [#allocation6], %s28
      %s30 = sshll.u32 [#allocation5], 4
      %s31 = int_to_ptr.vmem [resolvable:$true] %s30
      %36 = dma.hbm_to_vmem [thread:$0]  %s1, 256, %s31, [#allocation6], 128, 128, 8
    $region9: #{tpu_custom_call.1} parent=1 // pred_fallthru
      _
    // Predicated region
    $region10: #{tpu_custom_call.1} parent=1 // pred_check
      _
    $region11: #{tpu_custom_call.1} parent=1 // pred_check_branch
      %38 = sbr.rel (0) target = $region13
    $region12: #{tpu_custom_call.1} parent=1 // pred_region
      %s40 = ssub.s32 256, 256
      %41 = vsyncadd [#allocation6], %s40
      %s42 = sshll.u32 [#allocation7], 4
      %s43 = int_to_ptr.vmem [resolvable:$true] %s42
      %48 = dma.hbm_to_vmem [thread:$0]  %s2, 256, %s43, [#allocation6], 128, 128, 8
    $region13: #{tpu_custom_call.1} parent=1 // pred_fallthru
      _
    // Predicated region
    $region14: #{tpu_custom_call.1} parent=1 // pred_check
      _
    $region15: #{tpu_custom_call.1} parent=1 // pred_check_branch
      %50 = sbr.rel (0) target = $region17
    $region16: #{tpu_custom_call.1} parent=1 // pred_region
      %s52 = ssub.s32 2048, 2048
      %53 = vsyncadd [#allocation9], %s52
      %s54 = sshll.u32 [#allocation8], 4
      %s55 = int_to_ptr.vmem [resolvable:$true] %s54
      %60 = dma.hbm_to_vmem [thread:$0]  %s3, 2048, %s55, [#allocation9], 128, 128, 8
    $region17: #{tpu_custom_call.1} parent=1 // pred_fallthru
      _
    // Predicated region
    $region18: #{tpu_custom_call.1} parent=1 // pred_check
      _
    $region19: #{tpu_custom_call.1} parent=1 // pred_check_branch
      %62 = sbr.rel (0) target = $region21
    $region20: #{tpu_custom_call.1} parent=1 // pred_region
      %63 = dma.done [#allocation3], 256
    $region21: #{tpu_custom_call.1} parent=1 // pred_fallthru
      _
    // Predicated region
    $region22: #{tpu_custom_call.1} parent=1 // pred_check
      _
    $region23: #{tpu_custom_call.1} parent=1 // pred_check_branch
      %65 = sbr.rel (0) target = $region25
    $region24: #{tpu_custom_call.1} parent=1 // pred_region
      %66 = dma.done [#allocation6], 256
    $region25: #{tpu_custom_call.1} parent=1 // pred_fallthru
      _
    // Predicated region
    $region26: #{tpu_custom_call.1} parent=1 // pred_check
      _
    $region27: #{tpu_custom_call.1} parent=1 // pred_check_branch
      %68 = sbr.rel (0) target = $region29
    $region28: #{tpu_custom_call.1} parent=1 // pred_region
      %69 = dma.done [#allocation6], 256
    $region29: #{tpu_custom_call.1} parent=1 // pred_fallthru
      _
    // Predicated region
    $region30: #{tpu_custom_call.1} parent=1 // pred_check
      _
    $region31: #{tpu_custom_call.1} parent=1 // pred_check_branch
      %71 = sbr.rel (0) target = $region33
    $region32: #{tpu_custom_call.1} parent=1 // pred_region
      %72 = dma.done [#allocation9], 2048
    $region33: #{tpu_custom_call.1} parent=1 // pred_fallthru
      _
    %v73 = vld [vmem:[#allocation2] sm:$0xff]
    %v74 = vld [vmem:[#allocation2 + $0x8] sm:$0xff]
    %v75 = vld [vmem:[#allocation5] sm:$0xff]
    %v76 = vld [vmem:[#allocation5 + $0x8] sm:$0xff]
    %v77 = vld [vmem:[#allocation7] sm:$0xff]
    %v78 = vld [vmem:[#allocation7 + $0x8] sm:$0xff]
    %v79 = vld [vmem:[#allocation8] sm:$0xff]
    %v80 = vld [vmem:[#allocation8 + $0x8] sm:$0xff]
    %v81 = vld [vmem:[#allocation8 + $0x10] sm:$0xff]
    %v82 = vld [vmem:[#allocation8 + $0x18] sm:$0xff]
    %v83 = vld [vmem:[#allocation8 + $0x20] sm:$0xff]
    %v84 = vld [vmem:[#allocation8 + $0x28] sm:$0xff]
    %v85 = vld [vmem:[#allocation8 + $0x30] sm:$0xff]
    %v86 = vld [vmem:[#allocation8 + $0x38] sm:$0xff]
    %v87 = vld [vmem:[#allocation8 + $0x40] sm:$0xff]
    %v88 = vld [vmem:[#allocation8 + $0x48] sm:$0xff]
    %v89 = vld [vmem:[#allocation8 + $0x50] sm:$0xff]
    %v90 = vld [vmem:[#allocation8 + $0x58] sm:$0xff]
    %v91 = vld [vmem:[#allocation8 + $0x60] sm:$0xff]
    %v92 = vld [vmem:[#allocation8 + $0x68] sm:$0xff]
    %v93 = vld [vmem:[#allocation8 + $0x70] sm:$0xff]
    %v94 = vld [vmem:[#allocation8 + $0x78] sm:$0xff]
    %v95 = vmul.f32 %v73, %v73
    %v96 = vmul.f32 %v74, %v74
    %v97 = vmul.f32 %v75, %v75
    %v98 = vmul.f32 %v76, %v76
    %v99 = vmul.f32 %v73, %v75
    %v100 = vmul.f32 %v74, %v76
    %vm101 = vcmask 130048
    %v103 = vsel %vm101, %v77, 0
    %v106 = vsel %vm101, %v78, 0
    %108 = vmatprep.subr.mxu0 0.0
    %109 = vmatpush1.msra.mxu0 0.0
    %110 = vmatprep.subr.mxu0 0.0
    %111 = vmatpush1.msra.mxu0 0.0
    %112 = vmatprep.subr.mxu0 0.0
    %113 = vmatpush1.msra.mxu0 0.0
    %114 = vmatprep.subr.mxu0 0.0
    %115 = vmatpush1.msra.mxu0 0.0
    %116 = vmatprep.subr.mxu0 0.0
    %117 = vmatpush1.msra.mxu0 0.0
    %118 = vmatprep.subr.mxu0 0.0
    %119 = vmatpush1.msra.mxu0 0.0
    %120 = vmatprep.subr.mxu0 0.0
    %121 = vmatpush1.msra.mxu0 0.0
    %122 = vmatprep.subr.mxu0 0.0
    %123 = vmatpush1.msra.mxu0 0.0
    %124 = vmatprep.subr.mxu0 0.0
    %125 = vmatpush1.msra.mxu0 0.0
    %126 = vmatprep.subr.mxu0 0.0
    %127 = vmatpush1.msra.mxu0 0.0
    %128 = vmatprep.subr.mxu0 0.0
    %129 = vmatpush1.msra.mxu0 0.0
    %130 = vmatprep.subr.mxu0 0.0
    %131 = vmatpush1.msra.mxu0 0.0
    %132 = vmatprep.subr.mxu0 0.0
    %133 = vmatpush1.msra.mxu0 0.0
    %134 = vmatprep.subr.mxu0 0.0
    %135 = vmatpush1.msra.mxu0 0.0
    %v136 = vand.u32 %v76, 4294901760
    %137 = vmatprep.subr.mxu0 %v136
    %v138 = vand.u32 %v74, 4294901760
    %139 = vmatpush1.msra.mxu0 %v138
    %v140 = vand.u32 %v75, 4294901760
    %141 = vmatprep.subr.mxu0 %v140
    %v142 = vand.u32 %v73, 4294901760
    %143 = vmatpush1.msra.mxu0 %v142
    %144 = vmatprep.subr.mxu0 0.0
    %145 = vmatpush2.msra.mxu0 0.0
    %146 = vmatprep.subr.mxu0 0.0
    %147 = vmatpush2.msra.mxu0 0.0
    %148 = vmatprep.subr.mxu0 0.0
    %149 = vmatpush2.msra.mxu0 0.0
    %150 = vmatprep.subr.mxu0 0.0
    %151 = vmatpush2.msra.mxu0 0.0
    %152 = vmatprep.subr.mxu0 0.0
    %153 = vmatpush2.msra.mxu0 0.0
    %154 = vmatprep.subr.mxu0 0.0
    %155 = vmatpush2.msra.mxu0 0.0
    %156 = vmatprep.subr.mxu0 0.0
    %157 = vmatpush2.msra.mxu0 0.0
    %158 = vmatprep.subr.mxu0 0.0
    %159 = vmatpush2.msra.mxu0 0.0
    %160 = vmatprep.subr.mxu0 0.0
    %161 = vmatpush2.msra.mxu0 0.0
    %162 = vmatprep.subr.mxu0 0.0
    %163 = vmatpush2.msra.mxu0 0.0
    %164 = vmatprep.subr.mxu0 0.0
    %165 = vmatpush2.msra.mxu0 0.0
    %166 = vmatprep.subr.mxu0 0.0
    %167 = vmatpush2.msra.mxu0 0.0
    %168 = vmatprep.subr.mxu0 0.0
    %169 = vmatpush2.msra.mxu0 0.0
    %170 = vmatprep.subr.mxu0 0.0
    %171 = vmatpush2.msra.mxu0 0.0
    %172 = vmatprep.subr.mxu0 0.0
    %173 = vmatpush2.msra.mxu0 0.0
    %174 = vmatprep.subr.mxu0 0.0
    %175 = vmatpush2.msra.mxu0 0.0
    %176 = vmatprep.mubr.f32.mxu0 0.0
    %v177 = vand.u32 %v103, 4294901760
    %v178 = vsub.f32 %v103, %v177
    %v179 = vand.u32 %v178, 4294901760
    %v180 = vsub.f32 %v178, %v179
    %v181 = vand.u32 %v180, 4294901760
    %182 = vmatmul.mubr.f32.gmra.mxu0 %v181
    %v183 = vpop.f32.mrf.mxu0
    %v184 = vadd.f32 0.0, %v183
    %v185 = vpop.f32.mrf.mxu0
    %v186 = vadd.f32 0.0, %v185
    %187 = vmatprep.mubr.f32.mxu0 0.0
    %v188 = vand.u32 %v106, 4294901760
    %v189 = vsub.f32 %v106, %v188
    %v190 = vand.u32 %v189, 4294901760
    %v191 = vsub.f32 %v189, %v190
    %v192 = vand.u32 %v191, 4294901760
    %193 = vmatmul.mubr.f32.gmra.mxu0 %v192
    %v194 = vpop.f32.mrf.mxu0
    %v195 = vadd.f32 0.0, %v194
    %v196 = vpop.f32.mrf.mxu0
    %v197 = vadd.f32 0.0, %v196
    %198 = vdwg.mxu0
    %199 = vmatprep.subr.mxu0 0.0
    %200 = vmatpush1.msra.mxu0 0.0
    %201 = vmatprep.subr.mxu0 0.0
    %202 = vmatpush1.msra.mxu0 0.0
    %203 = vmatprep.subr.mxu0 0.0
    %204 = vmatpush1.msra.mxu0 0.0
    %205 = vmatprep.subr.mxu0 0.0
    %206 = vmatpush1.msra.mxu0 0.0
    %207 = vmatprep.subr.mxu0 0.0
    %208 = vmatpush1.msra.mxu0 0.0
    %209 = vmatprep.subr.mxu0 0.0
    %210 = vmatpush1.msra.mxu0 0.0
    %211 = vmatprep.subr.mxu0 0.0
    %212 = vmatpush1.msra.mxu0 0.0
    %213 = vmatprep.subr.mxu0 0.0
    %214 = vmatpush1.msra.mxu0 0.0
    %215 = vmatprep.subr.mxu0 0.0
    %216 = vmatpush1.msra.mxu0 0.0
    %217 = vmatprep.subr.mxu0 0.0
    %218 = vmatpush1.msra.mxu0 0.0
    %219 = vmatprep.subr.mxu0 0.0
    %220 = vmatpush1.msra.mxu0 0.0
    %221 = vmatprep.subr.mxu0 0.0
    %222 = vmatpush1.msra.mxu0 0.0
    %223 = vmatprep.subr.mxu0 0.0
    %224 = vmatpush1.msra.mxu0 0.0
    %225 = vmatprep.subr.mxu0 0.0
    %226 = vmatpush1.msra.mxu0 0.0
    %v227 = vand.u32 %v76, 4294901760
    %v228 = vsub.f32 %v76, %v227
    %v229 = vand.u32 %v228, 4294901760
    %v230 = vsub.f32 %v228, %v229
    %v231 = vand.u32 %v230, 4294901760
    %232 = vmatprep.subr.mxu0 %v231
    %v233 = vand.u32 %v74, 4294901760
    %v234 = vsub.f32 %v74, %v233
    %v235 = vand.u32 %v234, 4294901760
    %v236 = vsub.f32 %v234, %v235
    %v237 = vand.u32 %v236, 4294901760
    %238 = vmatpush1.msra.mxu0 %v237
    %v239 = vand.u32 %v75, 4294901760
    %v240 = vsub.f32 %v75, %v239
    %v241 = vand.u32 %v240, 4294901760
    %v242 = vsub.f32 %v240, %v241
    %v243 = vand.u32 %v242, 4294901760
    %244 = vmatprep.subr.mxu0 %v243
    %v245 = vand.u32 %v73, 4294901760
    %v246 = vsub.f32 %v73, %v245
    %v247 = vand.u32 %v246, 4294901760
    %v248 = vsub.f32 %v246, %v247
    %v249 = vand.u32 %v248, 4294901760
    %250 = vmatpush1.msra.mxu0 %v249
    %251 = vmatprep.subr.mxu0 0.0
    %252 = vmatpush2.msra.mxu0 0.0
    %253 = vmatprep.subr.mxu0 0.0
    %254 = vmatpush2.msra.mxu0 0.0
    %255 = vmatprep.subr.mxu0 0.0
    %256 = vmatpush2.msra.mxu0 0.0
    %257 = vmatprep.subr.mxu0 0.0
    %258 = vmatpush2.msra.mxu0 0.0
    %259 = vmatprep.subr.mxu0 0.0
    %260 = vmatpush2.msra.mxu0 0.0
    %261 = vmatprep.subr.mxu0 0.0
    %262 = vmatpush2.msra.mxu0 0.0
    %263 = vmatprep.subr.mxu0 0.0
    %264 = vmatpush2.msra.mxu0 0.0
    %265 = vmatprep.subr.mxu0 0.0
    %266 = vmatpush2.msra.mxu0 0.0
    %267 = vmatprep.subr.mxu0 0.0
    %268 = vmatpush2.msra.mxu0 0.0
    %269 = vmatprep.subr.mxu0 0.0
    %270 = vmatpush2.msra.mxu0 0.0
    %271 = vmatprep.subr.mxu0 0.0
    %272 = vmatpush2.msra.mxu0 0.0
    %273 = vmatprep.subr.mxu0 0.0
    %274 = vmatpush2.msra.mxu0 0.0
    %275 = vmatprep.subr.mxu0 0.0
    %276 = vmatpush2.msra.mxu0 0.0
    %277 = vmatprep.subr.mxu0 0.0
    %278 = vmatpush2.msra.mxu0 0.0
    %279 = vmatprep.subr.mxu0 0.0
    %280 = vmatpush2.msra.mxu0 0.0
    %281 = vmatprep.subr.mxu0 0.0
    %282 = vmatpush2.msra.mxu0 0.0
    %283 = vmatprep.mubr.f32.mxu0 0.0
    %v284 = vand.u32 %v103, 4294901760
    %285 = vmatmul.mubr.f32.gmra.mxu0 %v284
    %v286 = vpop.f32.mrf.mxu0
    %v287 = vadd.f32 %v184, %v286
    %v288 = vpop.f32.mrf.mxu0
    %v289 = vadd.f32 %v186, %v288
    %290 = vmatprep.mubr.f32.mxu0 0.0
    %v291 = vand.u32 %v106, 4294901760
    %292 = vmatmul.mubr.f32.gmra.mxu0 %v291
    %v293 = vpop.f32.mrf.mxu0
    %v294 = vadd.f32 %v195, %v293
    %v295 = vpop.f32.mrf.mxu0
    %v296 = vadd.f32 %v197, %v295
    %297 = vdwg.mxu0
    %298 = vmatprep.subr.mxu0 0.0
    %299 = vmatpush1.msra.mxu0 0.0
    %300 = vmatprep.subr.mxu0 0.0
    %301 = vmatpush1.msra.mxu0 0.0
    %302 = vmatprep.subr.mxu0 0.0
    %303 = vmatpush1.msra.mxu0 0.0
    %304 = vmatprep.subr.mxu0 0.0
    %305 = vmatpush1.msra.mxu0 0.0
    %306 = vmatprep.subr.mxu0 0.0
    %307 = vmatpush1.msra.mxu0 0.0
    %308 = vmatprep.subr.mxu0 0.0
    %309 = vmatpush1.msra.mxu0 0.0
    %310 = vmatprep.subr.mxu0 0.0
    %311 = vmatpush1.msra.mxu0 0.0
    %312 = vmatprep.subr.mxu0 0.0
    %313 = vmatpush1.msra.mxu0 0.0
    %314 = vmatprep.subr.mxu0 0.0
    %315 = vmatpush1.msra.mxu0 0.0
    %316 = vmatprep.subr.mxu0 0.0
    %317 = vmatpush1.msra.mxu0 0.0
    %318 = vmatprep.subr.mxu0 0.0
    %319 = vmatpush1.msra.mxu0 0.0
    %320 = vmatprep.subr.mxu0 0.0
    %321 = vmatpush1.msra.mxu0 0.0
    %322 = vmatprep.subr.mxu0 0.0
    %323 = vmatpush1.msra.mxu0 0.0
    %324 = vmatprep.subr.mxu0 0.0
    %325 = vmatpush1.msra.mxu0 0.0
    %v326 = vand.u32 %v76, 4294901760
    %v327 = vsub.f32 %v76, %v326
    %328 = vmatprep.subr.mxu0 %v327
    %v329 = vand.u32 %v74, 4294901760
    %v330 = vsub.f32 %v74, %v329
    %331 = vmatpush1.msra.mxu0 %v330
    %v332 = vand.u32 %v75, 4294901760
    %v333 = vsub.f32 %v75, %v332
    %334 = vmatprep.subr.mxu0 %v333
    %v335 = vand.u32 %v73, 4294901760
    %v336 = vsub.f32 %v73, %v335
    %337 = vmatpush1.msra.mxu0 %v336
    %338 = vmatprep.subr.mxu0 0.0
    %339 = vmatpush2.msra.mxu0 0.0
    %340 = vmatprep.subr.mxu0 0.0
    %341 = vmatpush2.msra.mxu0 0.0
    %342 = vmatprep.subr.mxu0 0.0
    %343 = vmatpush2.msra.mxu0 0.0
    %344 = vmatprep.subr.mxu0 0.0
    %345 = vmatpush2.msra.mxu0 0.0
    %346 = vmatprep.subr.mxu0 0.0
    %347 = vmatpush2.msra.mxu0 0.0
    %348 = vmatprep.subr.mxu0 0.0
    %349 = vmatpush2.msra.mxu0 0.0
    %350 = vmatprep.subr.mxu0 0.0
    %351 = vmatpush2.msra.mxu0 0.0
    %352 = vmatprep.subr.mxu0 0.0
    %353 = vmatpush2.msra.mxu0 0.0
    %354 = vmatprep.subr.mxu0 0.0
    %355 = vmatpush2.msra.mxu0 0.0
    %356 = vmatprep.subr.mxu0 0.0
    %357 = vmatpush2.msra.mxu0 0.0
    %358 = vmatprep.subr.mxu0 0.0
    %359 = vmatpush2.msra.mxu0 0.0
    %360 = vmatprep.subr.mxu0 0.0
    %361 = vmatpush2.msra.mxu0 0.0
    %362 = vmatprep.subr.mxu0 0.0
    %363 = vmatpush2.msra.mxu0 0.0
    %364 = vmatprep.subr.mxu0 0.0
    %365 = vmatpush2.msra.mxu0 0.0
    %366 = vmatprep.subr.mxu0 0.0
    %367 = vmatpush2.msra.mxu0 0.0
    %368 = vmatprep.subr.mxu0 0.0
    %369 = vmatpush2.msra.mxu0 0.0
    %370 = vmatprep.mubr.f32.mxu0 0.0
    %v371 = vand.u32 %v103, 4294901760
    %v372 = vsub.f32 %v103, %v371
    %373 = vmatmul.mubr.f32.gmra.mxu0 %v372
    %v374 = vpop.f32.mrf.mxu0
    %v375 = vadd.f32 %v287, %v374
    %v376 = vpop.f32.mrf.mxu0
    %v377 = vadd.f32 %v289, %v376
    %378 = vmatprep.mubr.f32.mxu0 0.0
    %v379 = vand.u32 %v106, 4294901760
    %v380 = vsub.f32 %v106, %v379
    %381 = vmatmul.mubr.f32.gmra.mxu0 %v380
    %v382 = vpop.f32.mrf.mxu0
    %v383 = vadd.f32 %v294, %v382
    %v384 = vpop.f32.mrf.mxu0
    %v385 = vadd.f32 %v296, %v384
    %386 = vdwg.mxu0
    %387 = vmatprep.subr.mxu0 0.0
    %388 = vmatpush1.msra.mxu0 0.0
    %389 = vmatprep.subr.mxu0 0.0
    %390 = vmatpush1.msra.mxu0 0.0
    %391 = vmatprep.subr.mxu0 0.0
    %392 = vmatpush1.msra.mxu0 0.0
    %393 = vmatprep.subr.mxu0 0.0
    %394 = vmatpush1.msra.mxu0 0.0
    %395 = vmatprep.subr.mxu0 0.0
    %396 = vmatpush1.msra.mxu0 0.0
    %397 = vmatprep.subr.mxu0 0.0
    %398 = vmatpush1.msra.mxu0 0.0
    %399 = vmatprep.subr.mxu0 0.0
    %400 = vmatpush1.msra.mxu0 0.0
    %401 = vmatprep.subr.mxu0 0.0
    %402 = vmatpush1.msra.mxu0 0.0
    %403 = vmatprep.subr.mxu0 0.0
    %404 = vmatpush1.msra.mxu0 0.0
    %405 = vmatprep.subr.mxu0 0.0
    %406 = vmatpush1.msra.mxu0 0.0
    %407 = vmatprep.subr.mxu0 0.0
    %408 = vmatpush1.msra.mxu0 0.0
    %409 = vmatprep.subr.mxu0 0.0
    %410 = vmatpush1.msra.mxu0 0.0
    %411 = vmatprep.subr.mxu0 0.0
    %412 = vmatpush1.msra.mxu0 0.0
    %413 = vmatprep.subr.mxu0 0.0
    %414 = vmatpush1.msra.mxu0 0.0
    %v415 = vand.u32 %v76, 4294901760
    %416 = vmatprep.subr.mxu0 %v415
    %v417 = vand.u32 %v74, 4294901760
    %418 = vmatpush1.msra.mxu0 %v417
    %v419 = vand.u32 %v75, 4294901760
    %420 = vmatprep.subr.mxu0 %v419
    %v421 = vand.u32 %v73, 4294901760
    %422 = vmatpush1.msra.mxu0 %v421
    %423 = vmatprep.subr.mxu0 0.0
    %424 = vmatpush2.msra.mxu0 0.0
    %425 = vmatprep.subr.mxu0 0.0
    %426 = vmatpush2.msra.mxu0 0.0
    %427 = vmatprep.subr.mxu0 0.0
    %428 = vmatpush2.msra.mxu0 0.0
    %429 = vmatprep.subr.mxu0 0.0
    %430 = vmatpush2.msra.mxu0 0.0
    %431 = vmatprep.subr.mxu0 0.0
    %432 = vmatpush2.msra.mxu0 0.0
    %433 = vmatprep.subr.mxu0 0.0
    %434 = vmatpush2.msra.mxu0 0.0
    %435 = vmatprep.subr.mxu0 0.0
    %436 = vmatpush2.msra.mxu0 0.0
    %437 = vmatprep.subr.mxu0 0.0
    %438 = vmatpush2.msra.mxu0 0.0
    %439 = vmatprep.subr.mxu0 0.0
    %440 = vmatpush2.msra.mxu0 0.0
    %441 = vmatprep.subr.mxu0 0.0
    %442 = vmatpush2.msra.mxu0 0.0
    %443 = vmatprep.subr.mxu0 0.0
    %444 = vmatpush2.msra.mxu0 0.0
    %445 = vmatprep.subr.mxu0 0.0
    %446 = vmatpush2.msra.mxu0 0.0
    %447 = vmatprep.subr.mxu0 0.0
    %448 = vmatpush2.msra.mxu0 0.0
    %449 = vmatprep.subr.mxu0 0.0
    %450 = vmatpush2.msra.mxu0 0.0
    %451 = vmatprep.subr.mxu0 0.0
    %452 = vmatpush2.msra.mxu0 0.0
    %453 = vmatprep.subr.mxu0 0.0
    %454 = vmatpush2.msra.mxu0 0.0
    %455 = vmatprep.mubr.f32.mxu0 0.0
    %v456 = vand.u32 %v103, 4294901760
    %v457 = vsub.f32 %v103, %v456
    %v458 = vand.u32 %v457, 4294901760
    %459 = vmatmul.mubr.f32.gmra.mxu0 %v458
    %v460 = vpop.f32.mrf.mxu0
    %v461 = vadd.f32 %v375, %v460
    %v462 = vpop.f32.mrf.mxu0
    %v463 = vadd.f32 %v377, %v462
    %464 = vmatprep.mubr.f32.mxu0 0.0
    %v465 = vand.u32 %v106, 4294901760
    %v466 = vsub.f32 %v106, %v465
    %v467 = vand.u32 %v466, 4294901760
    %468 = vmatmul.mubr.f32.gmra.mxu0 %v467
    %v469 = vpop.f32.mrf.mxu0
    %v470 = vadd.f32 %v383, %v469
    %v471 = vpop.f32.mrf.mxu0
    %v472 = vadd.f32 %v385, %v471
    %473 = vdwg.mxu0
    %474 = vmatprep.subr.mxu0 0.0
    %475 = vmatpush1.msra.mxu0 0.0
    %476 = vmatprep.subr.mxu0 0.0
    %477 = vmatpush1.msra.mxu0 0.0
    %478 = vmatprep.subr.mxu0 0.0
    %479 = vmatpush1.msra.mxu0 0.0
    %480 = vmatprep.subr.mxu0 0.0
    %481 = vmatpush1.msra.mxu0 0.0
    %482 = vmatprep.subr.mxu0 0.0
    %483 = vmatpush1.msra.mxu0 0.0
    %484 = vmatprep.subr.mxu0 0.0
    %485 = vmatpush1.msra.mxu0 0.0
    %486 = vmatprep.subr.mxu0 0.0
    %487 = vmatpush1.msra.mxu0 0.0
    %488 = vmatprep.subr.mxu0 0.0
    %489 = vmatpush1.msra.mxu0 0.0
    %490 = vmatprep.subr.mxu0 0.0
    %491 = vmatpush1.msra.mxu0 0.0
    %492 = vmatprep.subr.mxu0 0.0
    %493 = vmatpush1.msra.mxu0 0.0
    %494 = vmatprep.subr.mxu0 0.0
    %495 = vmatpush1.msra.mxu0 0.0
    %496 = vmatprep.subr.mxu0 0.0
    %497 = vmatpush1.msra.mxu0 0.0
    %498 = vmatprep.subr.mxu0 0.0
    %499 = vmatpush1.msra.mxu0 0.0
    %500 = vmatprep.subr.mxu0 0.0
    %501 = vmatpush1.msra.mxu0 0.0
    %v502 = vand.u32 %v76, 4294901760
    %v503 = vsub.f32 %v76, %v502
    %v504 = vand.u32 %v503, 4294901760
    %505 = vmatprep.subr.mxu0 %v504
    %v506 = vand.u32 %v74, 4294901760
    %v507 = vsub.f32 %v74, %v506
    %v508 = vand.u32 %v507, 4294901760
    %509 = vmatpush1.msra.mxu0 %v508
    %v510 = vand.u32 %v75, 4294901760
    %v511 = vsub.f32 %v75, %v510
    %v512 = vand.u32 %v511, 4294901760
    %513 = vmatprep.subr.mxu0 %v512
    %v514 = vand.u32 %v73, 4294901760
    %v515 = vsub.f32 %v73, %v514
    %v516 = vand.u32 %v515, 4294901760
    %517 = vmatpush1.msra.mxu0 %v516
    %518 = vmatprep.subr.mxu0 0.0
    %519 = vmatpush2.msra.mxu0 0.0
    %520 = vmatprep.subr.mxu0 0.0
    %521 = vmatpush2.msra.mxu0 0.0
    %522 = vmatprep.subr.mxu0 0.0
    %523 = vmatpush2.msra.mxu0 0.0
    %524 = vmatprep.subr.mxu0 0.0
    %525 = vmatpush2.msra.mxu0 0.0
    %526 = vmatprep.subr.mxu0 0.0
    %527 = vmatpush2.msra.mxu0 0.0
    %528 = vmatprep.subr.mxu0 0.0
    %529 = vmatpush2.msra.mxu0 0.0
    %530 = vmatprep.subr.mxu0 0.0
    %531 = vmatpush2.msra.mxu0 0.0
    %532 = vmatprep.subr.mxu0 0.0
    %533 = vmatpush2.msra.mxu0 0.0
    %534 = vmatprep.subr.mxu0 0.0
    %535 = vmatpush2.msra.mxu0 0.0
    %536 = vmatprep.subr.mxu0 0.0
    %537 = vmatpush2.msra.mxu0 0.0
    %538 = vmatprep.subr.mxu0 0.0
    %539 = vmatpush2.msra.mxu0 0.0
    %540 = vmatprep.subr.mxu0 0.0
    %541 = vmatpush2.msra.mxu0 0.0
    %542 = vmatprep.subr.mxu0 0.0
    %543 = vmatpush2.msra.mxu0 0.0
    %544 = vmatprep.subr.mxu0 0.0
    %545 = vmatpush2.msra.mxu0 0.0
    %546 = vmatprep.subr.mxu0 0.0
    %547 = vmatpush2.msra.mxu0 0.0
    %548 = vmatprep.subr.mxu0 0.0
    %549 = vmatpush2.msra.mxu0 0.0
    %550 = vmatprep.mubr.f32.mxu0 0.0
    %v551 = vand.u32 %v103, 4294901760
    %552 = vmatmul.mubr.f32.gmra.mxu0 %v551
    %v553 = vpop.f32.mrf.mxu0
    %v554 = vadd.f32 %v461, %v553
    %v555 = vpop.f32.mrf.mxu0
    %v556 = vadd.f32 %v463, %v555
    %557 = vmatprep.mubr.f32.mxu0 0.0
    %v558 = vand.u32 %v106, 4294901760
    %559 = vmatmul.mubr.f32.gmra.mxu0 %v558
    %v560 = vpop.f32.mrf.mxu0
    %v561 = vadd.f32 %v470, %v560
    %v562 = vpop.f32.mrf.mxu0
    %v563 = vadd.f32 %v472, %v562
    %564 = vdwg.mxu0
    %565 = vmatprep.subr.mxu0 0.0
    %566 = vmatpush1.msra.mxu0 0.0
    %567 = vmatprep.subr.mxu0 0.0
    %568 = vmatpush1.msra.mxu0 0.0
    %569 = vmatprep.subr.mxu0 0.0
    %570 = vmatpush1.msra.mxu0 0.0
    %571 = vmatprep.subr.mxu0 0.0
    %572 = vmatpush1.msra.mxu0 0.0
    %573 = vmatprep.subr.mxu0 0.0
    %574 = vmatpush1.msra.mxu0 0.0
    %575 = vmatprep.subr.mxu0 0.0
    %576 = vmatpush1.msra.mxu0 0.0
    %577 = vmatprep.subr.mxu0 0.0
    %578 = vmatpush1.msra.mxu0 0.0
    %579 = vmatprep.subr.mxu0 0.0
    %580 = vmatpush1.msra.mxu0 0.0
    %581 = vmatprep.subr.mxu0 0.0
    %582 = vmatpush1.msra.mxu0 0.0
    %583 = vmatprep.subr.mxu0 0.0
    %584 = vmatpush1.msra.mxu0 0.0
    %585 = vmatprep.subr.mxu0 0.0
    %586 = vmatpush1.msra.mxu0 0.0
    %587 = vmatprep.subr.mxu0 0.0
    %588 = vmatpush1.msra.mxu0 0.0
    %589 = vmatprep.subr.mxu0 0.0
    %590 = vmatpush1.msra.mxu0 0.0
    %591 = vmatprep.subr.mxu0 0.0
    %592 = vmatpush1.msra.mxu0 0.0
    %v593 = vand.u32 %v76, 4294901760
    %594 = vmatprep.subr.mxu0 %v593
    %v595 = vand.u32 %v74, 4294901760
    %596 = vmatpush1.msra.mxu0 %v595
    %v597 = vand.u32 %v75, 4294901760
    %598 = vmatprep.subr.mxu0 %v597
    %v599 = vand.u32 %v73, 4294901760
    %600 = vmatpush1.msra.mxu0 %v599
    %601 = vmatprep.subr.mxu0 0.0
    %602 = vmatpush2.msra.mxu0 0.0
    %603 = vmatprep.subr.mxu0 0.0
    %604 = vmatpush2.msra.mxu0 0.0
    %605 = vmatprep.subr.mxu0 0.0
    %606 = vmatpush2.msra.mxu0 0.0
    %607 = vmatprep.subr.mxu0 0.0
    %608 = vmatpush2.msra.mxu0 0.0
    %609 = vmatprep.subr.mxu0 0.0
    %610 = vmatpush2.msra.mxu0 0.0
    %611 = vmatprep.subr.mxu0 0.0
    %612 = vmatpush2.msra.mxu0 0.0
    %613 = vmatprep.subr.mxu0 0.0
    %614 = vmatpush2.msra.mxu0 0.0
    %615 = vmatprep.subr.mxu0 0.0
    %616 = vmatpush2.msra.mxu0 0.0
    %617 = vmatprep.subr.mxu0 0.0
    %618 = vmatpush2.msra.mxu0 0.0
    %619 = vmatprep.subr.mxu0 0.0
    %620 = vmatpush2.msra.mxu0 0.0
    %621 = vmatprep.subr.mxu0 0.0
    %622 = vmatpush2.msra.mxu0 0.0
    %623 = vmatprep.subr.mxu0 0.0
    %624 = vmatpush2.msra.mxu0 0.0
    %625 = vmatprep.subr.mxu0 0.0
    %626 = vmatpush2.msra.mxu0 0.0
    %627 = vmatprep.subr.mxu0 0.0
    %628 = vmatpush2.msra.mxu0 0.0
    %629 = vmatprep.subr.mxu0 0.0
    %630 = vmatpush2.msra.mxu0 0.0
    %631 = vmatprep.subr.mxu0 0.0
    %632 = vmatpush2.msra.mxu0 0.0
    %633 = vmatprep.mubr.f32.mxu0 0.0
    %v634 = vand.u32 %v103, 4294901760
    %635 = vmatmul.mubr.f32.gmra.mxu0 %v634
    %v636 = vpop.f32.mrf.mxu0
    %v637 = vadd.f32 %v554, %v636
    %v638 = vpop.f32.mrf.mxu0
    %v639 = vadd.f32 %v556, %v638
    %640 = vmatprep.mubr.f32.mxu0 0.0
    %v641 = vand.u32 %v106, 4294901760
    %642 = vmatmul.mubr.f32.gmra.mxu0 %v641
    %v643 = vpop.f32.mrf.mxu0
    %v644 = vadd.f32 %v561, %v643
    %v645 = vpop.f32.mrf.mxu0
    %v646 = vadd.f32 %v563, %v645
    %647 = vdwg.mxu0
    %648 = vmatprep.subr.mxu0 0.0
    %649 = vmatpush1.msra.mxu0 0.0
    %650 = vmatprep.subr.mxu0 0.0
    %651 = vmatpush1.msra.mxu0 0.0
    %652 = vmatprep.subr.mxu0 0.0
    %653 = vmatpush1.msra.mxu0 0.0
    %654 = vmatprep.subr.mxu0 0.0
    %655 = vmatpush1.msra.mxu0 0.0
    %656 = vmatprep.subr.mxu0 0.0
    %657 = vmatpush1.msra.mxu0 0.0
    %658 = vmatprep.subr.mxu0 0.0
    %659 = vmatpush1.msra.mxu0 0.0
    %660 = vmatprep.subr.mxu0 0.0
    %661 = vmatpush1.msra.mxu0 0.0
    %662 = vmatprep.subr.mxu0 0.0
    %663 = vmatpush1.msra.mxu0 0.0
    %664 = vmatprep.subr.mxu0 0.0
    %665 = vmatpush1.msra.mxu0 0.0
    %666 = vmatprep.subr.mxu0 0.0
    %667 = vmatpush1.msra.mxu0 0.0
    %668 = vmatprep.subr.mxu0 0.0
    %669 = vmatpush1.msra.mxu0 0.0
    %670 = vmatprep.subr.mxu0 0.0
    %671 = vmatpush1.msra.mxu0 0.0
    %672 = vmatprep.subr.mxu0 0.0
    %673 = vmatpush1.msra.mxu0 0.0
    %674 = vmatprep.subr.mxu0 0.0
    %675 = vmatpush1.msra.mxu0 0.0
    %v676 = vand.u32 %v98, 4294901760
    %677 = vmatprep.subr.mxu0 %v676
    %v678 = vand.u32 %v96, 4294901760
    %679 = vmatpush1.msra.mxu0 %v678
    %v680 = vand.u32 %v97, 4294901760
    %681 = vmatprep.subr.mxu0 %v680
    %v682 = vand.u32 %v95, 4294901760
    %683 = vmatpush1.msra.mxu0 %v682
    %684 = vmatprep.subr.mxu0 0.0
    %685 = vmatpush2.msra.mxu0 0.0
    %686 = vmatprep.subr.mxu0 0.0
    %687 = vmatpush2.msra.mxu0 0.0
    %688 = vmatprep.subr.mxu0 0.0
    %689 = vmatpush2.msra.mxu0 0.0
    %690 = vmatprep.subr.mxu0 0.0
    %691 = vmatpush2.msra.mxu0 0.0
    %692 = vmatprep.subr.mxu0 0.0
    %693 = vmatpush2.msra.mxu0 0.0
    %694 = vmatprep.subr.mxu0 0.0
    %695 = vmatpush2.msra.mxu0 0.0
    %696 = vmatprep.subr.mxu0 0.0
    %697 = vmatpush2.msra.mxu0 0.0
    %698 = vmatprep.subr.mxu0 0.0
    %699 = vmatpush2.msra.mxu0 0.0
    %700 = vmatprep.subr.mxu0 0.0
    %701 = vmatpush2.msra.mxu0 0.0
    %702 = vmatprep.subr.mxu0 0.0
    %703 = vmatpush2.msra.mxu0 0.0
    %704 = vmatprep.subr.mxu0 0.0
    %705 = vmatpush2.msra.mxu0 0.0
    %706 = vmatprep.subr.mxu0 0.0
    %707 = vmatpush2.msra.mxu0 0.0
    %708 = vmatprep.subr.mxu0 0.0
    %709 = vmatpush2.msra.mxu0 0.0
    %710 = vmatprep.subr.mxu0 0.0
    %711 = vmatpush2.msra.mxu0 0.0
    %712 = vmatprep.subr.mxu0 0.0
    %713 = vmatpush2.msra.mxu0 0.0
    %714 = vmatprep.subr.mxu0 0.0
    %715 = vmatpush2.msra.mxu0 0.0
    %716 = vmatprep.mubr.f32.mxu0 0.0
    %v717 = vand.u32 %v103, 4294901760
    %v718 = vsub.f32 %v103, %v717
    %v719 = vand.u32 %v718, 4294901760
    %v720 = vsub.f32 %v718, %v719
    %v721 = vand.u32 %v720, 4294901760
    %722 = vmatmul.mubr.f32.gmra.mxu0 %v721
    %v723 = vpop.f32.mrf.mxu0
    %v724 = vadd.f32 0.0, %v723
    %v725 = vpop.f32.mrf.mxu0
    %v726 = vadd.f32 0.0, %v725
    %727 = vmatprep.mubr.f32.mxu0 0.0
    %v728 = vand.u32 %v106, 4294901760
    %v729 = vsub.f32 %v106, %v728
    %v730 = vand.u32 %v729, 4294901760
    %v731 = vsub.f32 %v729, %v730
    %v732 = vand.u32 %v731, 4294901760
    %733 = vmatmul.mubr.f32.gmra.mxu0 %v732
    %v734 = vpop.f32.mrf.mxu0
    %v735 = vadd.f32 0.0, %v734
    %v736 = vpop.f32.mrf.mxu0
    %v737 = vadd.f32 0.0, %v736
    %738 = vdwg.mxu0
    %739 = vmatprep.subr.mxu0 0.0
    %740 = vmatpush1.msra.mxu0 0.0
    %741 = vmatprep.subr.mxu0 0.0
    %742 = vmatpush1.msra.mxu0 0.0
    %743 = vmatprep.subr.mxu0 0.0
    %744 = vmatpush1.msra.mxu0 0.0
    %745 = vmatprep.subr.mxu0 0.0
    %746 = vmatpush1.msra.mxu0 0.0
    %747 = vmatprep.subr.mxu0 0.0
    %748 = vmatpush1.msra.mxu0 0.0
    %749 = vmatprep.subr.mxu0 0.0
    %750 = vmatpush1.msra.mxu0 0.0
    %751 = vmatprep.subr.mxu0 0.0
    %752 = vmatpush1.msra.mxu0 0.0
    %753 = vmatprep.subr.mxu0 0.0
    %754 = vmatpush1.msra.mxu0 0.0
    %755 = vmatprep.subr.mxu0 0.0
    %756 = vmatpush1.msra.mxu0 0.0
    %757 = vmatprep.subr.mxu0 0.0
    %758 = vmatpush1.msra.mxu0 0.0
    %759 = vmatprep.subr.mxu0 0.0
    %760 = vmatpush1.msra.mxu0 0.0
    %761 = vmatprep.subr.mxu0 0.0
    %762 = vmatpush1.msra.mxu0 0.0
    %763 = vmatprep.subr.mxu0 0.0
    %764 = vmatpush1.msra.mxu0 0.0
    %765 = vmatprep.subr.mxu0 0.0
    %766 = vmatpush1.msra.mxu0 0.0
    %v767 = vand.u32 %v98, 4294901760
    %v768 = vsub.f32 %v98, %v767
    %v769 = vand.u32 %v768, 4294901760
    %v770 = vsub.f32 %v768, %v769
    %v771 = vand.u32 %v770, 4294901760
    %772 = vmatprep.subr.mxu0 %v771
    %v773 = vand.u32 %v96, 4294901760
    %v774 = vsub.f32 %v96, %v773
    %v775 = vand.u32 %v774, 4294901760
    %v776 = vsub.f32 %v774, %v775
    %v777 = vand.u32 %v776, 4294901760
    %778 = vmatpush1.msra.mxu0 %v777
    %v779 = vand.u32 %v97, 4294901760
    %v780 = vsub.f32 %v97, %v779
    %v781 = vand.u32 %v780, 4294901760
    %v782 = vsub.f32 %v780, %v781
    %v783 = vand.u32 %v782, 4294901760
    %784 = vmatprep.subr.mxu0 %v783
    %v785 = vand.u32 %v95, 4294901760
    %v786 = vsub.f32 %v95, %v785
    %v787 = vand.u32 %v786, 4294901760
    %v788 = vsub.f32 %v786, %v787
    %v789 = vand.u32 %v788, 4294901760
    %790 = vmatpush1.msra.mxu0 %v789
    %791 = vmatprep.subr.mxu0 0.0
    %792 = vmatpush2.msra.mxu0 0.0
    %793 = vmatprep.subr.mxu0 0.0
    %794 = vmatpush2.msra.mxu0 0.0
    %795 = vmatprep.subr.mxu0 0.0
    %796 = vmatpush2.msra.mxu0 0.0
    %797 = vmatprep.subr.mxu0 0.0
    %798 = vmatpush2.msra.mxu0 0.0
    %799 = vmatprep.subr.mxu0 0.0
    %800 = vmatpush2.msra.mxu0 0.0
    %801 = vmatprep.subr.mxu0 0.0
    %802 = vmatpush2.msra.mxu0 0.0
    %803 = vmatprep.subr.mxu0 0.0
    %804 = vmatpush2.msra.mxu0 0.0
    %805 = vmatprep.subr.mxu0 0.0
    %806 = vmatpush2.msra.mxu0 0.0
    %807 = vmatprep.subr.mxu0 0.0
    %808 = vmatpush2.msra.mxu0 0.0
    %809 = vmatprep.subr.mxu0 0.0
    %810 = vmatpush2.msra.mxu0 0.0
    %811 = vmatprep.subr.mxu0 0.0
    %812 = vmatpush2.msra.mxu0 0.0
    %813 = vmatprep.subr.mxu0 0.0
    %814 = vmatpush2.msra.mxu0 0.0
    %815 = vmatprep.subr.mxu0 0.0
    %816 = vmatpush2.msra.mxu0 0.0
    %817 = vmatprep.subr.mxu0 0.0
    %818 = vmatpush2.msra.mxu0 0.0
    %819 = vmatprep.subr.mxu0 0.0
    %820 = vmatpush2.msra.mxu0 0.0
    %821 = vmatprep.subr.mxu0 0.0
    %822 = vmatpush2.msra.mxu0 0.0
    %823 = vmatprep.mubr.f32.mxu0 0.0
    %v824 = vand.u32 %v103, 4294901760
    %825 = vmatmul.mubr.f32.gmra.mxu0 %v824
    %v826 = vpop.f32.mrf.mxu0
    %v827 = vadd.f32 %v724, %v826
    %v828 = vpop.f32.mrf.mxu0
    %v829 = vadd.f32 %v726, %v828
    %830 = vmatprep.mubr.f32.mxu0 0.0
    %v831 = vand.u32 %v106, 4294901760
    %832 = vmatmul.mubr.f32.gmra.mxu0 %v831
    %v833 = vpop.f32.mrf.mxu0
    %v834 = vadd.f32 %v735, %v833
    %v835 = vpop.f32.mrf.mxu0
    %v836 = vadd.f32 %v737, %v835
    %837 = vdwg.mxu0
    %838 = vmatprep.subr.mxu0 0.0
    %839 = vmatpush1.msra.mxu0 0.0
    %840 = vmatprep.subr.mxu0 0.0
    %841 = vmatpush1.msra.mxu0 0.0
    %842 = vmatprep.subr.mxu0 0.0
    %843 = vmatpush1.msra.mxu0 0.0
    %844 = vmatprep.subr.mxu0 0.0
    %845 = vmatpush1.msra.mxu0 0.0
    %846 = vmatprep.subr.mxu0 0.0
    %847 = vmatpush1.msra.mxu0 0.0
    %848 = vmatprep.subr.mxu0 0.0
    %849 = vmatpush1.msra.mxu0 0.0
    %850 = vmatprep.subr.mxu0 0.0
    %851 = vmatpush1.msra.mxu0 0.0
    %852 = vmatprep.subr.mxu0 0.0
    %853 = vmatpush1.msra.mxu0 0.0
    %854 = vmatprep.subr.mxu0 0.0
    %855 = vmatpush1.msra.mxu0 0.0
    %856 = vmatprep.subr.mxu0 0.0
    %857 = vmatpush1.msra.mxu0 0.0
    %858 = vmatprep.subr.mxu0 0.0
    %859 = vmatpush1.msra.mxu0 0.0
    %860 = vmatprep.subr.mxu0 0.0
    %861 = vmatpush1.msra.mxu0 0.0
    %862 = vmatprep.subr.mxu0 0.0
    %863 = vmatpush1.msra.mxu0 0.0
    %864 = vmatprep.subr.mxu0 0.0
    %865 = vmatpush1.msra.mxu0 0.0
    %v866 = vand.u32 %v98, 4294901760
    %v867 = vsub.f32 %v98, %v866
    %868 = vmatprep.subr.mxu0 %v867
    %v869 = vand.u32 %v96, 4294901760
    %v870 = vsub.f32 %v96, %v869
    %871 = vmatpush1.msra.mxu0 %v870
    %v872 = vand.u32 %v97, 4294901760
    %v873 = vsub.f32 %v97, %v872
    %874 = vmatprep.subr.mxu0 %v873
    %v875 = vand.u32 %v95, 4294901760
    %v876 = vsub.f32 %v95, %v875
    %877 = vmatpush1.msra.mxu0 %v876
    %878 = vmatprep.subr.mxu0 0.0
    %879 = vmatpush2.msra.mxu0 0.0
    %880 = vmatprep.subr.mxu0 0.0
    %881 = vmatpush2.msra.mxu0 0.0
    %882 = vmatprep.subr.mxu0 0.0
    %883 = vmatpush2.msra.mxu0 0.0
    %884 = vmatprep.subr.mxu0 0.0
    %885 = vmatpush2.msra.mxu0 0.0
    %886 = vmatprep.subr.mxu0 0.0
    %887 = vmatpush2.msra.mxu0 0.0
    %888 = vmatprep.subr.mxu0 0.0
    %889 = vmatpush2.msra.mxu0 0.0
    %890 = vmatprep.subr.mxu0 0.0
    %891 = vmatpush2.msra.mxu0 0.0
    %892 = vmatprep.subr.mxu0 0.0
    %893 = vmatpush2.msra.mxu0 0.0
    %894 = vmatprep.subr.mxu0 0.0
    %895 = vmatpush2.msra.mxu0 0.0
    %896 = vmatprep.subr.mxu0 0.0
    %897 = vmatpush2.msra.mxu0 0.0
    %898 = vmatprep.subr.mxu0 0.0
    %899 = vmatpush2.msra.mxu0 0.0
    %900 = vmatprep.subr.mxu0 0.0
    %901 = vmatpush2.msra.mxu0 0.0
    %902 = vmatprep.subr.mxu0 0.0
    %903 = vmatpush2.msra.mxu0 0.0
    %904 = vmatprep.subr.mxu0 0.0
    %905 = vmatpush2.msra.mxu0 0.0
    %906 = vmatprep.subr.mxu0 0.0
    %907 = vmatpush2.msra.mxu0 0.0
    %908 = vmatprep.subr.mxu0 0.0
    %909 = vmatpush2.msra.mxu0 0.0
    %910 = vmatprep.mubr.f32.mxu0 0.0
    %v911 = vand.u32 %v103, 4294901760
    %v912 = vsub.f32 %v103, %v911
    %913 = vmatmul.mubr.f32.gmra.mxu0 %v912
    %v914 = vpop.f32.mrf.mxu0
    %v915 = vadd.f32 %v827, %v914
    %v916 = vpop.f32.mrf.mxu0
    %v917 = vadd.f32 %v829, %v916
    %918 = vmatprep.mubr.f32.mxu0 0.0
    %v919 = vand.u32 %v106, 4294901760
    %v920 = vsub.f32 %v106, %v919
    %921 = vmatmul.mubr.f32.gmra.mxu0 %v920
    %v922 = vpop.f32.mrf.mxu0
    %v923 = vadd.f32 %v834, %v922
    %v924 = vpop.f32.mrf.mxu0
    %v925 = vadd.f32 %v836, %v924
    %926 = vdwg.mxu0
    %927 = vmatprep.subr.mxu0 0.0
    %928 = vmatpush1.msra.mxu0 0.0
    %929 = vmatprep.subr.mxu0 0.0
    %930 = vmatpush1.msra.mxu0 0.0
    %931 = vmatprep.subr.mxu0 0.0
    %932 = vmatpush1.msra.mxu0 0.0
    %933 = vmatprep.subr.mxu0 0.0
    %934 = vmatpush1.msra.mxu0 0.0
    %935 = vmatprep.subr.mxu0 0.0
    %936 = vmatpush1.msra.mxu0 0.0
    %937 = vmatprep.subr.mxu0 0.0
    %938 = vmatpush1.msra.mxu0 0.0
    %939 = vmatprep.subr.mxu0 0.0
    %940 = vmatpush1.msra.mxu0 0.0
    %941 = vmatprep.subr.mxu0 0.0
    %942 = vmatpush1.msra.mxu0 0.0
    %943 = vmatprep.subr.mxu0 0.0
    %944 = vmatpush1.msra.mxu0 0.0
    %945 = vmatprep.subr.mxu0 0.0
    %946 = vmatpush1.msra.mxu0 0.0
    %947 = vmatprep.subr.mxu0 0.0
    %948 = vmatpush1.msra.mxu0 0.0
    %949 = vmatprep.subr.mxu0 0.0
    %950 = vmatpush1.msra.mxu0 0.0
    %951 = vmatprep.subr.mxu0 0.0
    %952 = vmatpush1.msra.mxu0 0.0
    %953 = vmatprep.subr.mxu0 0.0
    %954 = vmatpush1.msra.mxu0 0.0
    %v955 = vand.u32 %v98, 4294901760
    %956 = vmatprep.subr.mxu0 %v955
    %v957 = vand.u32 %v96, 4294901760
    %958 = vmatpush1.msra.mxu0 %v957
    %v959 = vand.u32 %v97, 4294901760
    %960 = vmatprep.subr.mxu0 %v959
    %v961 = vand.u32 %v95, 4294901760
    %962 = vmatpush1.msra.mxu0 %v961
    %963 = vmatprep.subr.mxu0 0.0
    %964 = vmatpush2.msra.mxu0 0.0
    %965 = vmatprep.subr.mxu0 0.0
    %966 = vmatpush2.msra.mxu0 0.0
    %967 = vmatprep.subr.mxu0 0.0
    %968 = vmatpush2.msra.mxu0 0.0
    %969 = vmatprep.subr.mxu0 0.0
    %970 = vmatpush2.msra.mxu0 0.0
    %971 = vmatprep.subr.mxu0 0.0
    %972 = vmatpush2.msra.mxu0 0.0
    %973 = vmatprep.subr.mxu0 0.0
    %974 = vmatpush2.msra.mxu0 0.0
    %975 = vmatprep.subr.mxu0 0.0
    %976 = vmatpush2.msra.mxu0 0.0
    %977 = vmatprep.subr.mxu0 0.0
    %978 = vmatpush2.msra.mxu0 0.0
    %979 = vmatprep.subr.mxu0 0.0
    %980 = vmatpush2.msra.mxu0 0.0
    %981 = vmatprep.subr.mxu0 0.0
    %982 = vmatpush2.msra.mxu0 0.0
    %983 = vmatprep.subr.mxu0 0.0
    %984 = vmatpush2.msra.mxu0 0.0
    %985 = vmatprep.subr.mxu0 0.0
    %986 = vmatpush2.msra.mxu0 0.0
    %987 = vmatprep.subr.mxu0 0.0
    %988 = vmatpush2.msra.mxu0 0.0
    %989 = vmatprep.subr.mxu0 0.0
    %990 = vmatpush2.msra.mxu0 0.0
    %991 = vmatprep.subr.mxu0 0.0
    %992 = vmatpush2.msra.mxu0 0.0
    %993 = vmatprep.subr.mxu0 0.0
    %994 = vmatpush2.msra.mxu0 0.0
    %995 = vmatprep.mubr.f32.mxu0 0.0
    %v996 = vand.u32 %v103, 4294901760
    %v997 = vsub.f32 %v103, %v996
    %v998 = vand.u32 %v997, 4294901760
    %999 = vmatmul.mubr.f32.gmra.mxu0 %v998
    %v1000 = vpop.f32.mrf.mxu0
    %v1001 = vadd.f32 %v915, %v1000
    %v1002 = vpop.f32.mrf.mxu0
    %v1003 = vadd.f32 %v917, %v1002
    %1004 = vmatprep.mubr.f32.mxu0 0.0
    %v1005 = vand.u32 %v106, 4294901760
    %v1006 = vsub.f32 %v106, %v1005
    %v1007 = vand.u32 %v1006, 4294901760
    %1008 = vmatmul.mubr.f32.gmra.mxu0 %v1007
    %v1009 = vpop.f32.mrf.mxu0
    %v1010 = vadd.f32 %v923, %v1009
    %v1011 = vpop.f32.mrf.mxu0
    %v1012 = vadd.f32 %v925, %v1011
    %1013 = vdwg.mxu0
    %1014 = vmatprep.subr.mxu0 0.0
    %1015 = vmatpush1.msra.mxu0 0.0
    %1016 = vmatprep.subr.mxu0 0.0
    %1017 = vmatpush1.msra.mxu0 0.0
    %1018 = vmatprep.subr.mxu0 0.0
    %1019 = vmatpush1.msra.mxu0 0.0
    %1020 = vmatprep.subr.mxu0 0.0
    %1021 = vmatpush1.msra.mxu0 0.0
    %1022 = vmatprep.subr.mxu0 0.0
    %1023 = vmatpush1.msra.mxu0 0.0
    %1024 = vmatprep.subr.mxu0 0.0
    %1025 = vmatpush1.msra.mxu0 0.0
    %1026 = vmatprep.subr.mxu0 0.0
    %1027 = vmatpush1.msra.mxu0 0.0
    %1028 = vmatprep.subr.mxu0 0.0
    %1029 = vmatpush1.msra.mxu0 0.0
    %1030 = vmatprep.subr.mxu0 0.0
    %1031 = vmatpush1.msra.mxu0 0.0
    %1032 = vmatprep.subr.mxu0 0.0
    %1033 = vmatpush1.msra.mxu0 0.0
    %1034 = vmatprep.subr.mxu0 0.0
    %1035 = vmatpush1.msra.mxu0 0.0
    %1036 = vmatprep.subr.mxu0 0.0
    %1037 = vmatpush1.msra.mxu0 0.0
    %1038 = vmatprep.subr.mxu0 0.0
    %1039 = vmatpush1.msra.mxu0 0.0
    %1040 = vmatprep.subr.mxu0 0.0
    %1041 = vmatpush1.msra.mxu0 0.0
    %v1042 = vand.u32 %v98, 4294901760
    %v1043 = vsub.f32 %v98, %v1042
    %v1044 = vand.u32 %v1043, 4294901760
    %1045 = vmatprep.subr.mxu0 %v1044
    %v1046 = vand.u32 %v96, 4294901760
    %v1047 = vsub.f32 %v96, %v1046
    %v1048 = vand.u32 %v1047, 4294901760
    %1049 = vmatpush1.msra.mxu0 %v1048
    %v1050 = vand.u32 %v97, 4294901760
    %v1051 = vsub.f32 %v97, %v1050
    %v1052 = vand.u32 %v1051, 4294901760
    %1053 = vmatprep.subr.mxu0 %v1052
    %v1054 = vand.u32 %v95, 4294901760
    %v1055 = vsub.f32 %v95, %v1054
    %v1056 = vand.u32 %v1055, 4294901760
    %1057 = vmatpush1.msra.mxu0 %v1056
    %1058 = vmatprep.subr.mxu0 0.0
    %1059 = vmatpush2.msra.mxu0 0.0
    %1060 = vmatprep.subr.mxu0 0.0
    %1061 = vmatpush2.msra.mxu0 0.0
    %1062 = vmatprep.subr.mxu0 0.0
    %1063 = vmatpush2.msra.mxu0 0.0
    %1064 = vmatprep.subr.mxu0 0.0
    %1065 = vmatpush2.msra.mxu0 0.0
    %1066 = vmatprep.subr.mxu0 0.0
    %1067 = vmatpush2.msra.mxu0 0.0
    %1068 = vmatprep.subr.mxu0 0.0
    %1069 = vmatpush2.msra.mxu0 0.0
    %1070 = vmatprep.subr.mxu0 0.0
    %1071 = vmatpush2.msra.mxu0 0.0
    %1072 = vmatprep.subr.mxu0 0.0
    %1073 = vmatpush2.msra.mxu0 0.0
    %1074 = vmatprep.subr.mxu0 0.0
    %1075 = vmatpush2.msra.mxu0 0.0
    %1076 = vmatprep.subr.mxu0 0.0
    %1077 = vmatpush2.msra.mxu0 0.0
    %1078 = vmatprep.subr.mxu0 0.0
    %1079 = vmatpush2.msra.mxu0 0.0
    %1080 = vmatprep.subr.mxu0 0.0
    %1081 = vmatpush2.msra.mxu0 0.0
    %1082 = vmatprep.subr.mxu0 0.0
    %1083 = vmatpush2.msra.mxu0 0.0
    %1084 = vmatprep.subr.mxu0 0.0
    %1085 = vmatpush2.msra.mxu0 0.0
    %1086 = vmatprep.subr.mxu0 0.0
    %1087 = vmatpush2.msra.mxu0 0.0
    %1088 = vmatprep.subr.mxu0 0.0
    %1089 = vmatpush2.msra.mxu0 0.0
    %1090 = vmatprep.mubr.f32.mxu0 0.0
    %v1091 = vand.u32 %v103, 4294901760
    %1092 = vmatmul.mubr.f32.gmra.mxu0 %v1091
    %v1093 = vpop.f32.mrf.mxu0
    %v1094 = vadd.f32 %v1001, %v1093
    %v1095 = vpop.f32.mrf.mxu0
    %v1096 = vadd.f32 %v1003, %v1095
    %1097 = vmatprep.mubr.f32.mxu0 0.0
    %v1098 = vand.u32 %v106, 4294901760
    %1099 = vmatmul.mubr.f32.gmra.mxu0 %v1098
    %v1100 = vpop.f32.mrf.mxu0
    %v1101 = vadd.f32 %v1010, %v1100
    %v1102 = vpop.f32.mrf.mxu0
    %v1103 = vadd.f32 %v1012, %v1102
    %1104 = vdwg.mxu0
    %1105 = vmatprep.subr.mxu0 0.0
    %1106 = vmatpush1.msra.mxu0 0.0
    %1107 = vmatprep.subr.mxu0 0.0
    %1108 = vmatpush1.msra.mxu0 0.0
    %1109 = vmatprep.subr.mxu0 0.0
    %1110 = vmatpush1.msra.mxu0 0.0
    %1111 = vmatprep.subr.mxu0 0.0
    %1112 = vmatpush1.msra.mxu0 0.0
    %1113 = vmatprep.subr.mxu0 0.0
    %1114 = vmatpush1.msra.mxu0 0.0
    %1115 = vmatprep.subr.mxu0 0.0
    %1116 = vmatpush1.msra.mxu0 0.0
    %1117 = vmatprep.subr.mxu0 0.0
    %1118 = vmatpush1.msra.mxu0 0.0
    %1119 = vmatprep.subr.mxu0 0.0
    %1120 = vmatpush1.msra.mxu0 0.0
    %1121 = vmatprep.subr.mxu0 0.0
    %1122 = vmatpush1.msra.mxu0 0.0
    %1123 = vmatprep.subr.mxu0 0.0
    %1124 = vmatpush1.msra.mxu0 0.0
    %1125 = vmatprep.subr.mxu0 0.0
    %1126 = vmatpush1.msra.mxu0 0.0
    %1127 = vmatprep.subr.mxu0 0.0
    %1128 = vmatpush1.msra.mxu0 0.0
    %1129 = vmatprep.subr.mxu0 0.0
    %1130 = vmatpush1.msra.mxu0 0.0
    %1131 = vmatprep.subr.mxu0 0.0
    %1132 = vmatpush1.msra.mxu0 0.0
    %v1133 = vand.u32 %v98, 4294901760
    %1134 = vmatprep.subr.mxu0 %v1133
    %v1135 = vand.u32 %v96, 4294901760
    %1136 = vmatpush1.msra.mxu0 %v1135
    %v1137 = vand.u32 %v97, 4294901760
    %1138 = vmatprep.subr.mxu0 %v1137
    %v1139 = vand.u32 %v95, 4294901760
    %1140 = vmatpush1.msra.mxu0 %v1139
    %1141 = vmatprep.subr.mxu0 0.0
    %1142 = vmatpush2.msra.mxu0 0.0
    %1143 = vmatprep.subr.mxu0 0.0
    %1144 = vmatpush2.msra.mxu0 0.0
    %1145 = vmatprep.subr.mxu0 0.0
    %1146 = vmatpush2.msra.mxu0 0.0
    %1147 = vmatprep.subr.mxu0 0.0
    %1148 = vmatpush2.msra.mxu0 0.0
    %1149 = vmatprep.subr.mxu0 0.0
    %1150 = vmatpush2.msra.mxu0 0.0
    %1151 = vmatprep.subr.mxu0 0.0
    %1152 = vmatpush2.msra.mxu0 0.0
    %1153 = vmatprep.subr.mxu0 0.0
    %1154 = vmatpush2.msra.mxu0 0.0
    %1155 = vmatprep.subr.mxu0 0.0
    %1156 = vmatpush2.msra.mxu0 0.0
    %1157 = vmatprep.subr.mxu0 0.0
    %1158 = vmatpush2.msra.mxu0 0.0
    %1159 = vmatprep.subr.mxu0 0.0
    %1160 = vmatpush2.msra.mxu0 0.0
    %1161 = vmatprep.subr.mxu0 0.0
    %1162 = vmatpush2.msra.mxu0 0.0
    %1163 = vmatprep.subr.mxu0 0.0
    %1164 = vmatpush2.msra.mxu0 0.0
    %1165 = vmatprep.subr.mxu0 0.0
    %1166 = vmatpush2.msra.mxu0 0.0
    %1167 = vmatprep.subr.mxu0 0.0
    %1168 = vmatpush2.msra.mxu0 0.0
    %1169 = vmatprep.subr.mxu0 0.0
    %1170 = vmatpush2.msra.mxu0 0.0
    %1171 = vmatprep.subr.mxu0 0.0
    %1172 = vmatpush2.msra.mxu0 0.0
    %1173 = vmatprep.mubr.f32.mxu0 0.0
    %v1174 = vand.u32 %v103, 4294901760
    %1175 = vmatmul.mubr.f32.gmra.mxu0 %v1174
    %v1176 = vpop.f32.mrf.mxu0
    %v1177 = vadd.f32 %v1094, %v1176
    %v1178 = vpop.f32.mrf.mxu0
    %v1179 = vadd.f32 %v1096, %v1178
    %1180 = vmatprep.mubr.f32.mxu0 0.0
    %v1181 = vand.u32 %v106, 4294901760
    %1182 = vmatmul.mubr.f32.gmra.mxu0 %v1181
    %v1183 = vpop.f32.mrf.mxu0
    %v1184 = vadd.f32 %v1101, %v1183
    %v1185 = vpop.f32.mrf.mxu0
    %v1186 = vadd.f32 %v1103, %v1185
    %1187 = vdwg.mxu0
    %1188 = vmatprep.subr.mxu0 0.0
    %1189 = vmatpush1.msra.mxu0 0.0
    %1190 = vmatprep.subr.mxu0 0.0
    %1191 = vmatpush1.msra.mxu0 0.0
    %1192 = vmatprep.subr.mxu0 0.0
    %1193 = vmatpush1.msra.mxu0 0.0
    %1194 = vmatprep.subr.mxu0 0.0
    %1195 = vmatpush1.msra.mxu0 0.0
    %1196 = vmatprep.subr.mxu0 0.0
    %1197 = vmatpush1.msra.mxu0 0.0
    %1198 = vmatprep.subr.mxu0 0.0
    %1199 = vmatpush1.msra.mxu0 0.0
    %1200 = vmatprep.subr.mxu0 0.0
    %1201 = vmatpush1.msra.mxu0 0.0
    %1202 = vmatprep.subr.mxu0 0.0
    %1203 = vmatpush1.msra.mxu0 0.0
    %1204 = vmatprep.subr.mxu0 0.0
    %1205 = vmatpush1.msra.mxu0 0.0
    %1206 = vmatprep.subr.mxu0 0.0
    %1207 = vmatpush1.msra.mxu0 0.0
    %1208 = vmatprep.subr.mxu0 0.0
    %1209 = vmatpush1.msra.mxu0 0.0
    %1210 = vmatprep.subr.mxu0 0.0
    %1211 = vmatpush1.msra.mxu0 0.0
    %1212 = vmatprep.subr.mxu0 0.0
    %1213 = vmatpush1.msra.mxu0 0.0
    %1214 = vmatprep.subr.mxu0 0.0
    %1215 = vmatpush1.msra.mxu0 0.0
    %1216 = vmatprep.subr.mxu0 0.0
    %v1217 = vand.u32 %v100, 4294901760
    %1218 = vmatpush1.msra.mxu0 %v1217
    %1219 = vmatprep.subr.mxu0 0.0
    %v1220 = vand.u32 %v99, 4294901760
    %1221 = vmatpush1.msra.mxu0 %v1220
    %1222 = vmatprep.subr.mxu0 0.0
    %1223 = vmatpush2.msra.mxu0 0.0
    %1224 = vmatprep.subr.mxu0 0.0
    %1225 = vmatpush2.msra.mxu0 0.0
    %1226 = vmatprep.subr.mxu0 0.0
    %1227 = vmatpush2.msra.mxu0 0.0
    %1228 = vmatprep.subr.mxu0 0.0
    %1229 = vmatpush2.msra.mxu0 0.0
    %1230 = vmatprep.subr.mxu0 0.0
    %1231 = vmatpush2.msra.mxu0 0.0
    %1232 = vmatprep.subr.mxu0 0.0
    %1233 = vmatpush2.msra.mxu0 0.0
    %1234 = vmatprep.subr.mxu0 0.0
    %1235 = vmatpush2.msra.mxu0 0.0
    %1236 = vmatprep.subr.mxu0 0.0
    %1237 = vmatpush2.msra.mxu0 0.0
    %1238 = vmatprep.subr.mxu0 0.0
    %1239 = vmatpush2.msra.mxu0 0.0
    %1240 = vmatprep.subr.mxu0 0.0
    %1241 = vmatpush2.msra.mxu0 0.0
    %1242 = vmatprep.subr.mxu0 0.0
    %1243 = vmatpush2.msra.mxu0 0.0
    %1244 = vmatprep.subr.mxu0 0.0
    %1245 = vmatpush2.msra.mxu0 0.0
    %1246 = vmatprep.subr.mxu0 0.0
    %1247 = vmatpush2.msra.mxu0 0.0
    %1248 = vmatprep.subr.mxu0 0.0
    %1249 = vmatpush2.msra.mxu0 0.0
    %1250 = vmatprep.subr.mxu0 0.0
    %1251 = vmatpush2.msra.mxu0 0.0
    %1252 = vmatprep.subr.mxu0 0.0
    %1253 = vmatpush2.msra.mxu0 0.0
    %1254 = vmatprep.mubr.f32.mxu0 0.0
    %v1255 = vand.u32 %v103, 4294901760
    %v1256 = vsub.f32 %v103, %v1255
    %v1257 = vand.u32 %v1256, 4294901760
    %v1258 = vsub.f32 %v1256, %v1257
    %v1259 = vand.u32 %v1258, 4294901760
    %1260 = vmatmul.mubr.f32.gmra.mxu0 %v1259
    %v1261 = vpop.f32.mrf.mxu0
    %v1262 = vadd.f32 0.0, %v1261
    %v1263 = vpop.f32.mrf.mxu0
    %1264 = vmatprep.mubr.f32.mxu0 0.0
    %v1265 = vand.u32 %v106, 4294901760
    %v1266 = vsub.f32 %v106, %v1265
    %v1267 = vand.u32 %v1266, 4294901760
    %v1268 = vsub.f32 %v1266, %v1267
    %v1269 = vand.u32 %v1268, 4294901760
    %1270 = vmatmul.mubr.f32.gmra.mxu0 %v1269
    %v1271 = vpop.f32.mrf.mxu0
    %v1272 = vadd.f32 0.0, %v1271
    %v1273 = vpop.f32.mrf.mxu0
    %1274 = vdwg.mxu0
    %1275 = vmatprep.subr.mxu0 0.0
    %1276 = vmatpush1.msra.mxu0 0.0
    %1277 = vmatprep.subr.mxu0 0.0
    %1278 = vmatpush1.msra.mxu0 0.0
    %1279 = vmatprep.subr.mxu0 0.0
    %1280 = vmatpush1.msra.mxu0 0.0
    %1281 = vmatprep.subr.mxu0 0.0
    %1282 = vmatpush1.msra.mxu0 0.0
    %1283 = vmatprep.subr.mxu0 0.0
    %1284 = vmatpush1.msra.mxu0 0.0
    %1285 = vmatprep.subr.mxu0 0.0
    %1286 = vmatpush1.msra.mxu0 0.0
    %1287 = vmatprep.subr.mxu0 0.0
    %1288 = vmatpush1.msra.mxu0 0.0
    %1289 = vmatprep.subr.mxu0 0.0
    %1290 = vmatpush1.msra.mxu0 0.0
    %1291 = vmatprep.subr.mxu0 0.0
    %1292 = vmatpush1.msra.mxu0 0.0
    %1293 = vmatprep.subr.mxu0 0.0
    %1294 = vmatpush1.msra.mxu0 0.0
    %1295 = vmatprep.subr.mxu0 0.0
    %1296 = vmatpush1.msra.mxu0 0.0
    %1297 = vmatprep.subr.mxu0 0.0
    %1298 = vmatpush1.msra.mxu0 0.0
    %1299 = vmatprep.subr.mxu0 0.0
    %1300 = vmatpush1.msra.mxu0 0.0
    %1301 = vmatprep.subr.mxu0 0.0
    %1302 = vmatpush1.msra.mxu0 0.0
    %1303 = vmatprep.subr.mxu0 0.0
    %v1304 = vand.u32 %v100, 4294901760
    %v1305 = vsub.f32 %v100, %v1304
    %v1306 = vand.u32 %v1305, 4294901760
    %v1307 = vsub.f32 %v1305, %v1306
    %v1308 = vand.u32 %v1307, 4294901760
    %1309 = vmatpush1.msra.mxu0 %v1308
    %1310 = vmatprep.subr.mxu0 0.0
    %v1311 = vand.u32 %v99, 4294901760
    %v1312 = vsub.f32 %v99, %v1311
    %v1313 = vand.u32 %v1312, 4294901760
    %v1314 = vsub.f32 %v1312, %v1313
    %v1315 = vand.u32 %v1314, 4294901760
    %1316 = vmatpush1.msra.mxu0 %v1315
    %1317 = vmatprep.subr.mxu0 0.0
    %1318 = vmatpush2.msra.mxu0 0.0
    %1319 = vmatprep.subr.mxu0 0.0
    %1320 = vmatpush2.msra.mxu0 0.0
    %1321 = vmatprep.subr.mxu0 0.0
    %1322 = vmatpush2.msra.mxu0 0.0
    %1323 = vmatprep.subr.mxu0 0.0
    %1324 = vmatpush2.msra.mxu0 0.0
    %1325 = vmatprep.subr.mxu0 0.0
    %1326 = vmatpush2.msra.mxu0 0.0
    %1327 = vmatprep.subr.mxu0 0.0
    %1328 = vmatpush2.msra.mxu0 0.0
    %1329 = vmatprep.subr.mxu0 0.0
    %1330 = vmatpush2.msra.mxu0 0.0
    %1331 = vmatprep.subr.mxu0 0.0
    %1332 = vmatpush2.msra.mxu0 0.0
    %1333 = vmatprep.subr.mxu0 0.0
    %1334 = vmatpush2.msra.mxu0 0.0
    %1335 = vmatprep.subr.mxu0 0.0
    %1336 = vmatpush2.msra.mxu0 0.0
    %1337 = vmatprep.subr.mxu0 0.0
    %1338 = vmatpush2.msra.mxu0 0.0
    %1339 = vmatprep.subr.mxu0 0.0
    %1340 = vmatpush2.msra.mxu0 0.0
    %1341 = vmatprep.subr.mxu0 0.0
    %1342 = vmatpush2.msra.mxu0 0.0
    %1343 = vmatprep.subr.mxu0 0.0
    %1344 = vmatpush2.msra.mxu0 0.0
    %1345 = vmatprep.subr.mxu0 0.0
    %1346 = vmatpush2.msra.mxu0 0.0
    %1347 = vmatprep.subr.mxu0 0.0
    %1348 = vmatpush2.msra.mxu0 0.0
    %1349 = vmatprep.mubr.f32.mxu0 0.0
    %v1350 = vand.u32 %v103, 4294901760
    %1351 = vmatmul.mubr.f32.gmra.mxu0 %v1350
    %v1352 = vpop.f32.mrf.mxu0
    %v1353 = vadd.f32 %v1262, %v1352
    %v1354 = vpop.f32.mrf.mxu0
    %1355 = vmatprep.mubr.f32.mxu0 0.0
    %v1356 = vand.u32 %v106, 4294901760
    %1357 = vmatmul.mubr.f32.gmra.mxu0 %v1356
    %v1358 = vpop.f32.mrf.mxu0
    %v1359 = vadd.f32 %v1272, %v1358
    %v1360 = vpop.f32.mrf.mxu0
    %1361 = vdwg.mxu0
    %1362 = vmatprep.subr.mxu0 0.0
    %1363 = vmatpush1.msra.mxu0 0.0
    %1364 = vmatprep.subr.mxu0 0.0
    %1365 = vmatpush1.msra.mxu0 0.0
    %1366 = vmatprep.subr.mxu0 0.0
    %1367 = vmatpush1.msra.mxu0 0.0
    %1368 = vmatprep.subr.mxu0 0.0
    %1369 = vmatpush1.msra.mxu0 0.0
    %1370 = vmatprep.subr.mxu0 0.0
    %1371 = vmatpush1.msra.mxu0 0.0
    %1372 = vmatprep.subr.mxu0 0.0
    %1373 = vmatpush1.msra.mxu0 0.0
    %1374 = vmatprep.subr.mxu0 0.0
    %1375 = vmatpush1.msra.mxu0 0.0
    %1376 = vmatprep.subr.mxu0 0.0
    %1377 = vmatpush1.msra.mxu0 0.0
    %1378 = vmatprep.subr.mxu0 0.0
    %1379 = vmatpush1.msra.mxu0 0.0
    %1380 = vmatprep.subr.mxu0 0.0
    %1381 = vmatpush1.msra.mxu0 0.0
    %1382 = vmatprep.subr.mxu0 0.0
    %1383 = vmatpush1.msra.mxu0 0.0
    %1384 = vmatprep.subr.mxu0 0.0
    %1385 = vmatpush1.msra.mxu0 0.0
    %1386 = vmatprep.subr.mxu0 0.0
    %1387 = vmatpush1.msra.mxu0 0.0
    %1388 = vmatprep.subr.mxu0 0.0
    %1389 = vmatpush1.msra.mxu0 0.0
    %1390 = vmatprep.subr.mxu0 0.0
    %v1391 = vand.u32 %v100, 4294901760
    %v1392 = vsub.f32 %v100, %v1391
    %1393 = vmatpush1.msra.mxu0 %v1392
    %1394 = vmatprep.subr.mxu0 0.0
    %v1395 = vand.u32 %v99, 4294901760
    %v1396 = vsub.f32 %v99, %v1395
    %1397 = vmatpush1.msra.mxu0 %v1396
    %1398 = vmatprep.subr.mxu0 0.0
    %1399 = vmatpush2.msra.mxu0 0.0
    %1400 = vmatprep.subr.mxu0 0.0
    %1401 = vmatpush2.msra.mxu0 0.0
    %1402 = vmatprep.subr.mxu0 0.0
    %1403 = vmatpush2.msra.mxu0 0.0
    %1404 = vmatprep.subr.mxu0 0.0
    %1405 = vmatpush2.msra.mxu0 0.0
    %1406 = vmatprep.subr.mxu0 0.0
    %1407 = vmatpush2.msra.mxu0 0.0
    %1408 = vmatprep.subr.mxu0 0.0
    %1409 = vmatpush2.msra.mxu0 0.0
    %1410 = vmatprep.subr.mxu0 0.0
    %1411 = vmatpush2.msra.mxu0 0.0
    %1412 = vmatprep.subr.mxu0 0.0
    %1413 = vmatpush2.msra.mxu0 0.0
    %1414 = vmatprep.subr.mxu0 0.0
    %1415 = vmatpush2.msra.mxu0 0.0
    %1416 = vmatprep.subr.mxu0 0.0
    %1417 = vmatpush2.msra.mxu0 0.0
    %1418 = vmatprep.subr.mxu0 0.0
    %1419 = vmatpush2.msra.mxu0 0.0
    %1420 = vmatprep.subr.mxu0 0.0
    %1421 = vmatpush2.msra.mxu0 0.0
    %1422 = vmatprep.subr.mxu0 0.0
    %1423 = vmatpush2.msra.mxu0 0.0
    %1424 = vmatprep.subr.mxu0 0.0
    %1425 = vmatpush2.msra.mxu0 0.0
    %1426 = vmatprep.subr.mxu0 0.0
    %1427 = vmatpush2.msra.mxu0 0.0
    %1428 = vmatprep.subr.mxu0 0.0
    %1429 = vmatpush2.msra.mxu0 0.0
    %1430 = vmatprep.mubr.f32.mxu0 0.0
    %v1431 = vand.u32 %v103, 4294901760
    %v1432 = vsub.f32 %v103, %v1431
    %1433 = vmatmul.mubr.f32.gmra.mxu0 %v1432
    %v1434 = vpop.f32.mrf.mxu0
    %v1435 = vadd.f32 %v1353, %v1434
    %v1436 = vpop.f32.mrf.mxu0
    %1437 = vmatprep.mubr.f32.mxu0 0.0
    %v1438 = vand.u32 %v106, 4294901760
    %v1439 = vsub.f32 %v106, %v1438
    %1440 = vmatmul.mubr.f32.gmra.mxu0 %v1439
    %v1441 = vpop.f32.mrf.mxu0
    %v1442 = vadd.f32 %v1359, %v1441
    %v1443 = vpop.f32.mrf.mxu0
    %1444 = vdwg.mxu0
    %1445 = vmatprep.subr.mxu0 0.0
    %1446 = vmatpush1.msra.mxu0 0.0
    %1447 = vmatprep.subr.mxu0 0.0
    %1448 = vmatpush1.msra.mxu0 0.0
    %1449 = vmatprep.subr.mxu0 0.0
    %1450 = vmatpush1.msra.mxu0 0.0
    %1451 = vmatprep.subr.mxu0 0.0
    %1452 = vmatpush1.msra.mxu0 0.0
    %1453 = vmatprep.subr.mxu0 0.0
    %1454 = vmatpush1.msra.mxu0 0.0
    %1455 = vmatprep.subr.mxu0 0.0
    %1456 = vmatpush1.msra.mxu0 0.0
    %1457 = vmatprep.subr.mxu0 0.0
    %1458 = vmatpush1.msra.mxu0 0.0
    %1459 = vmatprep.subr.mxu0 0.0
    %1460 = vmatpush1.msra.mxu0 0.0
    %1461 = vmatprep.subr.mxu0 0.0
    %1462 = vmatpush1.msra.mxu0 0.0
    %1463 = vmatprep.subr.mxu0 0.0
    %1464 = vmatpush1.msra.mxu0 0.0
    %1465 = vmatprep.subr.mxu0 0.0
    %1466 = vmatpush1.msra.mxu0 0.0
    %1467 = vmatprep.subr.mxu0 0.0
    %1468 = vmatpush1.msra.mxu0 0.0
    %1469 = vmatprep.subr.mxu0 0.0
    %1470 = vmatpush1.msra.mxu0 0.0
    %1471 = vmatprep.subr.mxu0 0.0
    %1472 = vmatpush1.msra.mxu0 0.0
    %1473 = vmatprep.subr.mxu0 0.0
    %v1474 = vand.u32 %v100, 4294901760
    %1475 = vmatpush1.msra.mxu0 %v1474
    %1476 = vmatprep.subr.mxu0 0.0
    %v1477 = vand.u32 %v99, 4294901760
    %1478 = vmatpush1.msra.mxu0 %v1477
    %1479 = vmatprep.subr.mxu0 0.0
    %1480 = vmatpush2.msra.mxu0 0.0
    %1481 = vmatprep.subr.mxu0 0.0
    %1482 = vmatpush2.msra.mxu0 0.0
    %1483 = vmatprep.subr.mxu0 0.0
    %1484 = vmatpush2.msra.mxu0 0.0
    %1485 = vmatprep.subr.mxu0 0.0
    %1486 = vmatpush2.msra.mxu0 0.0
    %1487 = vmatprep.subr.mxu0 0.0
    %1488 = vmatpush2.msra.mxu0 0.0
    %1489 = vmatprep.subr.mxu0 0.0
    %1490 = vmatpush2.msra.mxu0 0.0
    %1491 = vmatprep.subr.mxu0 0.0
    %1492 = vmatpush2.msra.mxu0 0.0
    %1493 = vmatprep.subr.mxu0 0.0
    %1494 = vmatpush2.msra.mxu0 0.0
    %1495 = vmatprep.subr.mxu0 0.0
    %1496 = vmatpush2.msra.mxu0 0.0
    %1497 = vmatprep.subr.mxu0 0.0
    %1498 = vmatpush2.msra.mxu0 0.0
    %1499 = vmatprep.subr.mxu0 0.0
    %1500 = vmatpush2.msra.mxu0 0.0
    %1501 = vmatprep.subr.mxu0 0.0
    %1502 = vmatpush2.msra.mxu0 0.0
    %1503 = vmatprep.subr.mxu0 0.0
    %1504 = vmatpush2.msra.mxu0 0.0
    %1505 = vmatprep.subr.mxu0 0.0
    %1506 = vmatpush2.msra.mxu0 0.0
    %1507 = vmatprep.subr.mxu0 0.0
    %1508 = vmatpush2.msra.mxu0 0.0
    %1509 = vmatprep.subr.mxu0 0.0
    %1510 = vmatpush2.msra.mxu0 0.0
    %1511 = vmatprep.mubr.f32.mxu0 0.0
    %v1512 = vand.u32 %v103, 4294901760
    %v1513 = vsub.f32 %v103, %v1512
    %v1514 = vand.u32 %v1513, 4294901760
    %1515 = vmatmul.mubr.f32.gmra.mxu0 %v1514
    %v1516 = vpop.f32.mrf.mxu0
    %v1517 = vadd.f32 %v1435, %v1516
    %v1518 = vpop.f32.mrf.mxu0
    %1519 = vmatprep.mubr.f32.mxu0 0.0
    %v1520 = vand.u32 %v106, 4294901760
    %v1521 = vsub.f32 %v106, %v1520
    %v1522 = vand.u32 %v1521, 4294901760
    %1523 = vmatmul.mubr.f32.gmra.mxu0 %v1522
    %v1524 = vpop.f32.mrf.mxu0
    %v1525 = vadd.f32 %v1442, %v1524
    %v1526 = vpop.f32.mrf.mxu0
    %1527 = vdwg.mxu0
    %1528 = vmatprep.subr.mxu0 0.0
    %1529 = vmatpush1.msra.mxu0 0.0
    %1530 = vmatprep.subr.mxu0 0.0
    %1531 = vmatpush1.msra.mxu0 0.0
    %1532 = vmatprep.subr.mxu0 0.0
    %1533 = vmatpush1.msra.mxu0 0.0
    %1534 = vmatprep.subr.mxu0 0.0
    %1535 = vmatpush1.msra.mxu0 0.0
    %1536 = vmatprep.subr.mxu0 0.0
    %1537 = vmatpush1.msra.mxu0 0.0
    %1538 = vmatprep.subr.mxu0 0.0
    %1539 = vmatpush1.msra.mxu0 0.0
    %1540 = vmatprep.subr.mxu0 0.0
    %1541 = vmatpush1.msra.mxu0 0.0
    %1542 = vmatprep.subr.mxu0 0.0
    %1543 = vmatpush1.msra.mxu0 0.0
    %1544 = vmatprep.subr.mxu0 0.0
    %1545 = vmatpush1.msra.mxu0 0.0
    %1546 = vmatprep.subr.mxu0 0.0
    %1547 = vmatpush1.msra.mxu0 0.0
    %1548 = vmatprep.subr.mxu0 0.0
    %1549 = vmatpush1.msra.mxu0 0.0
    %1550 = vmatprep.subr.mxu0 0.0
    %1551 = vmatpush1.msra.mxu0 0.0
    %1552 = vmatprep.subr.mxu0 0.0
    %1553 = vmatpush1.msra.mxu0 0.0
    %1554 = vmatprep.subr.mxu0 0.0
    %1555 = vmatpush1.msra.mxu0 0.0
    %1556 = vmatprep.subr.mxu0 0.0
    %v1557 = vand.u32 %v100, 4294901760
    %v1558 = vsub.f32 %v100, %v1557
    %v1559 = vand.u32 %v1558, 4294901760
    %1560 = vmatpush1.msra.mxu0 %v1559
    %1561 = vmatprep.subr.mxu0 0.0
    %v1562 = vand.u32 %v99, 4294901760
    %v1563 = vsub.f32 %v99, %v1562
    %v1564 = vand.u32 %v1563, 4294901760
    %1565 = vmatpush1.msra.mxu0 %v1564
    %1566 = vmatprep.subr.mxu0 0.0
    %1567 = vmatpush2.msra.mxu0 0.0
    %1568 = vmatprep.subr.mxu0 0.0
    %1569 = vmatpush2.msra.mxu0 0.0
    %1570 = vmatprep.subr.mxu0 0.0
    %1571 = vmatpush2.msra.mxu0 0.0
    %1572 = vmatprep.subr.mxu0 0.0
    %1573 = vmatpush2.msra.mxu0 0.0
    %1574 = vmatprep.subr.mxu0 0.0
    %1575 = vmatpush2.msra.mxu0 0.0
    %1576 = vmatprep.subr.mxu0 0.0
    %1577 = vmatpush2.msra.mxu0 0.0
    %1578 = vmatprep.subr.mxu0 0.0
    %1579 = vmatpush2.msra.mxu0 0.0
    %1580 = vmatprep.subr.mxu0 0.0
    %1581 = vmatpush2.msra.mxu0 0.0
    %1582 = vmatprep.subr.mxu0 0.0
    %1583 = vmatpush2.msra.mxu0 0.0
    %1584 = vmatprep.subr.mxu0 0.0
    %1585 = vmatpush2.msra.mxu0 0.0
    %1586 = vmatprep.subr.mxu0 0.0
    %1587 = vmatpush2.msra.mxu0 0.0
    %1588 = vmatprep.subr.mxu0 0.0
    %1589 = vmatpush2.msra.mxu0 0.0
    %1590 = vmatprep.subr.mxu0 0.0
    %1591 = vmatpush2.msra.mxu0 0.0
    %1592 = vmatprep.subr.mxu0 0.0
    %1593 = vmatpush2.msra.mxu0 0.0
    %1594 = vmatprep.subr.mxu0 0.0
    %1595 = vmatpush2.msra.mxu0 0.0
    %1596 = vmatprep.subr.mxu0 0.0
    %1597 = vmatpush2.msra.mxu0 0.0
    %1598 = vmatprep.mubr.f32.mxu0 0.0
    %v1599 = vand.u32 %v103, 4294901760
    %1600 = vmatmul.mubr.f32.gmra.mxu0 %v1599
    %v1601 = vpop.f32.mrf.mxu0
    %v1602 = vadd.f32 %v1517, %v1601
    %v1603 = vpop.f32.mrf.mxu0
    %1604 = vmatprep.mubr.f32.mxu0 0.0
    %v1605 = vand.u32 %v106, 4294901760
    %1606 = vmatmul.mubr.f32.gmra.mxu0 %v1605
    %v1607 = vpop.f32.mrf.mxu0
    %v1608 = vadd.f32 %v1525, %v1607
    %v1609 = vpop.f32.mrf.mxu0
    %1610 = vdwg.mxu0
    %1611 = vmatprep.subr.mxu0 0.0
    %1612 = vmatpush1.msra.mxu0 0.0
    %1613 = vmatprep.subr.mxu0 0.0
    %1614 = vmatpush1.msra.mxu0 0.0
    %1615 = vmatprep.subr.mxu0 0.0
    %1616 = vmatpush1.msra.mxu0 0.0
    %1617 = vmatprep.subr.mxu0 0.0
    %1618 = vmatpush1.msra.mxu0 0.0
    %1619 = vmatprep.subr.mxu0 0.0
    %1620 = vmatpush1.msra.mxu0 0.0
    %1621 = vmatprep.subr.mxu0 0.0
    %1622 = vmatpush1.msra.mxu0 0.0
    %1623 = vmatprep.subr.mxu0 0.0
    %1624 = vmatpush1.msra.mxu0 0.0
    %1625 = vmatprep.subr.mxu0 0.0
    %1626 = vmatpush1.msra.mxu0 0.0
    %1627 = vmatprep.subr.mxu0 0.0
    %1628 = vmatpush1.msra.mxu0 0.0
    %1629 = vmatprep.subr.mxu0 0.0
    %1630 = vmatpush1.msra.mxu0 0.0
    %1631 = vmatprep.subr.mxu0 0.0
    %1632 = vmatpush1.msra.mxu0 0.0
    %1633 = vmatprep.subr.mxu0 0.0
    %1634 = vmatpush1.msra.mxu0 0.0
    %1635 = vmatprep.subr.mxu0 0.0
    %1636 = vmatpush1.msra.mxu0 0.0
    %1637 = vmatprep.subr.mxu0 0.0
    %1638 = vmatpush1.msra.mxu0 0.0
    %1639 = vmatprep.subr.mxu0 0.0
    %v1640 = vand.u32 %v100, 4294901760
    %1641 = vmatpush1.msra.mxu0 %v1640
    %1642 = vmatprep.subr.mxu0 0.0
    %v1643 = vand.u32 %v99, 4294901760
    %1644 = vmatpush1.msra.mxu0 %v1643
    %1645 = vmatprep.subr.mxu0 0.0
    %1646 = vmatpush2.msra.mxu0 0.0
    %1647 = vmatprep.subr.mxu0 0.0
    %1648 = vmatpush2.msra.mxu0 0.0
    %1649 = vmatprep.subr.mxu0 0.0
    %1650 = vmatpush2.msra.mxu0 0.0
    %1651 = vmatprep.subr.mxu0 0.0
    %1652 = vmatpush2.msra.mxu0 0.0
    %1653 = vmatprep.subr.mxu0 0.0
    %1654 = vmatpush2.msra.mxu0 0.0
    %1655 = vmatprep.subr.mxu0 0.0
    %1656 = vmatpush2.msra.mxu0 0.0
    %1657 = vmatprep.subr.mxu0 0.0
    %1658 = vmatpush2.msra.mxu0 0.0
    %1659 = vmatprep.subr.mxu0 0.0
    %1660 = vmatpush2.msra.mxu0 0.0
    %1661 = vmatprep.subr.mxu0 0.0
    %1662 = vmatpush2.msra.mxu0 0.0
    %1663 = vmatprep.subr.mxu0 0.0
    %1664 = vmatpush2.msra.mxu0 0.0
    %1665 = vmatprep.subr.mxu0 0.0
    %1666 = vmatpush2.msra.mxu0 0.0
    %1667 = vmatprep.subr.mxu0 0.0
    %1668 = vmatpush2.msra.mxu0 0.0
    %1669 = vmatprep.subr.mxu0 0.0
    %1670 = vmatpush2.msra.mxu0 0.0
    %1671 = vmatprep.subr.mxu0 0.0
    %1672 = vmatpush2.msra.mxu0 0.0
    %1673 = vmatprep.subr.mxu0 0.0
    %1674 = vmatpush2.msra.mxu0 0.0
    %1675 = vmatprep.subr.mxu0 0.0
    %1676 = vmatpush2.msra.mxu0 0.0
    %1677 = vmatprep.mubr.f32.mxu0 0.0
    %v1678 = vand.u32 %v103, 4294901760
    %1679 = vmatmul.mubr.f32.gmra.mxu0 %v1678
    %v1680 = vpop.f32.mrf.mxu0
    %v1681 = vadd.f32 %v1602, %v1680
    %v1682 = vpop.f32.mrf.mxu0
    %1683 = vmatprep.mubr.f32.mxu0 0.0
    %v1684 = vand.u32 %v106, 4294901760
    %1685 = vmatmul.mubr.f32.gmra.mxu0 %v1684
    %v1686 = vpop.f32.mrf.mxu0
    %v1687 = vadd.f32 %v1608, %v1686
    %v1688 = vpop.f32.mrf.mxu0
    %1689 = vdwg.mxu0
    %1690 = vmatprep.subr.mxu0 0.0
    %v1691 = vand.u32 %v94, 4294901760
    %1692 = vmatpush1.msra.mxu0 %v1691
    %1693 = vmatprep.subr.mxu0 0.0
    %v1694 = vand.u32 %v93, 4294901760
    %1695 = vmatpush1.msra.mxu0 %v1694
    %1696 = vmatprep.subr.mxu0 0.0
    %v1697 = vand.u32 %v92, 4294901760
    %1698 = vmatpush1.msra.mxu0 %v1697
    %1699 = vmatprep.subr.mxu0 0.0
    %v1700 = vand.u32 %v91, 4294901760
    %1701 = vmatpush1.msra.mxu0 %v1700
    %1702 = vmatprep.subr.mxu0 0.0
    %v1703 = vand.u32 %v90, 4294901760
    %1704 = vmatpush1.msra.mxu0 %v1703
    %1705 = vmatprep.subr.mxu0 0.0
    %v1706 = vand.u32 %v89, 4294901760
    %1707 = vmatpush1.msra.mxu0 %v1706
    %1708 = vmatprep.subr.mxu0 0.0
    %v1709 = vand.u32 %v88, 4294901760
    %1710 = vmatpush1.msra.mxu0 %v1709
    %1711 = vmatprep.subr.mxu0 0.0
    %v1712 = vand.u32 %v87, 4294901760
    %1713 = vmatpush1.msra.mxu0 %v1712
    %1714 = vmatprep.subr.mxu0 0.0
    %v1715 = vand.u32 %v86, 4294901760
    %1716 = vmatpush1.msra.mxu0 %v1715
    %1717 = vmatprep.subr.mxu0 0.0
    %v1718 = vand.u32 %v85, 4294901760
    %1719 = vmatpush1.msra.mxu0 %v1718
    %1720 = vmatprep.subr.mxu0 0.0
    %v1721 = vand.u32 %v84, 4294901760
    %1722 = vmatpush1.msra.mxu0 %v1721
    %1723 = vmatprep.subr.mxu0 0.0
    %v1724 = vand.u32 %v83, 4294901760
    %1725 = vmatpush1.msra.mxu0 %v1724
    %1726 = vmatprep.subr.mxu0 0.0
    %v1727 = vand.u32 %v82, 4294901760
    %1728 = vmatpush1.msra.mxu0 %v1727
    %1729 = vmatprep.subr.mxu0 0.0
    %v1730 = vand.u32 %v81, 4294901760
    %1731 = vmatpush1.msra.mxu0 %v1730
    %1732 = vmatprep.subr.mxu0 0.0
    %v1733 = vand.u32 %v80, 4294901760
    %1734 = vmatpush1.msra.mxu0 %v1733
    %1735 = vmatprep.subr.mxu0 0.0
    %v1736 = vand.u32 %v79, 4294901760
    %1737 = vmatpush1.msra.mxu0 %v1736
    %1738 = vmatprep.subr.mxu0 0.0
    %1739 = vmatpush2.msra.mxu0 0.0
    %1740 = vmatprep.subr.mxu0 0.0
    %1741 = vmatpush2.msra.mxu0 0.0
    %1742 = vmatprep.subr.mxu0 0.0
    %1743 = vmatpush2.msra.mxu0 0.0
    %1744 = vmatprep.subr.mxu0 0.0
    %1745 = vmatpush2.msra.mxu0 0.0
    %1746 = vmatprep.subr.mxu0 0.0
    %1747 = vmatpush2.msra.mxu0 0.0
    %1748 = vmatprep.subr.mxu0 0.0
    %1749 = vmatpush2.msra.mxu0 0.0
    %1750 = vmatprep.subr.mxu0 0.0
    %1751 = vmatpush2.msra.mxu0 0.0
    %1752 = vmatprep.subr.mxu0 0.0
    %1753 = vmatpush2.msra.mxu0 0.0
    %1754 = vmatprep.subr.mxu0 0.0
    %1755 = vmatpush2.msra.mxu0 0.0
    %1756 = vmatprep.subr.mxu0 0.0
    %1757 = vmatpush2.msra.mxu0 0.0
    %1758 = vmatprep.subr.mxu0 0.0
    %1759 = vmatpush2.msra.mxu0 0.0
    %1760 = vmatprep.subr.mxu0 0.0
    %1761 = vmatpush2.msra.mxu0 0.0
    %1762 = vmatprep.subr.mxu0 0.0
    %1763 = vmatpush2.msra.mxu0 0.0
    %1764 = vmatprep.subr.mxu0 0.0
    %1765 = vmatpush2.msra.mxu0 0.0
    %1766 = vmatprep.subr.mxu0 0.0
    %1767 = vmatpush2.msra.mxu0 0.0
    %1768 = vmatprep.subr.mxu0 0.0
    %1769 = vmatpush2.msra.mxu0 0.0
    %1770 = vmatprep.mubr.f32.mxu0 0.0
    %v1771 = vand.u32 %v637, 4294901760
    %v1772 = vsub.f32 %v637, %v1771
    %v1773 = vand.u32 %v1772, 4294901760
    %v1774 = vsub.f32 %v1772, %v1773
    %v1775 = vand.u32 %v1774, 4294901760
    %1776 = vmatmul.mubr.f32.gmra.mxu0 %v1775
    %v1777 = vpop.f32.mrf.mxu0
    %v1778 = vadd.f32 0.0, %v1777
    %v1779 = vpop.f32.mrf.mxu0
    %1780 = vmatprep.mubr.f32.mxu0 0.0
    %v1781 = vand.u32 %v644, 4294901760
    %v1782 = vsub.f32 %v644, %v1781
    %v1783 = vand.u32 %v1782, 4294901760
    %v1784 = vsub.f32 %v1782, %v1783
    %v1785 = vand.u32 %v1784, 4294901760
    %1786 = vmatmul.mubr.f32.gmra.mxu0 %v1785
    %v1787 = vpop.f32.mrf.mxu0
    %v1788 = vadd.f32 0.0, %v1787
    %v1789 = vpop.f32.mrf.mxu0
    %1790 = vmatprep.mubr.f32.mxu0 0.0
    %v1791 = vand.u32 %v639, 4294901760
    %v1792 = vsub.f32 %v639, %v1791
    %v1793 = vand.u32 %v1792, 4294901760
    %v1794 = vsub.f32 %v1792, %v1793
    %v1795 = vand.u32 %v1794, 4294901760
    %1796 = vmatmul.mubr.f32.gmra.mxu0 %v1795
    %v1797 = vpop.f32.mrf.mxu0
    %v1798 = vadd.f32 0.0, %v1797
    %v1799 = vpop.f32.mrf.mxu0
    %1800 = vmatprep.mubr.f32.mxu0 0.0
    %v1801 = vand.u32 %v646, 4294901760
    %v1802 = vsub.f32 %v646, %v1801
    %v1803 = vand.u32 %v1802, 4294901760
    %v1804 = vsub.f32 %v1802, %v1803
    %v1805 = vand.u32 %v1804, 4294901760
    %1806 = vmatmul.mubr.f32.gmra.mxu0 %v1805
    %v1807 = vpop.f32.mrf.mxu0
    %v1808 = vadd.f32 0.0, %v1807
    %v1809 = vpop.f32.mrf.mxu0
    %1810 = vmatprep.mubr.f32.mxu0 0.0
    %v1811 = vand.u32 %v1177, 4294901760
    %v1812 = vsub.f32 %v1177, %v1811
    %v1813 = vand.u32 %v1812, 4294901760
    %v1814 = vsub.f32 %v1812, %v1813
    %v1815 = vand.u32 %v1814, 4294901760
    %1816 = vmatmul.mubr.f32.gmra.mxu0 %v1815
    %v1817 = vpop.f32.mrf.mxu0
    %v1818 = vadd.f32 0.0, %v1817
    %v1819 = vpop.f32.mrf.mxu0
    %1820 = vmatprep.mubr.f32.mxu0 0.0
    %v1821 = vand.u32 %v1184, 4294901760
    %v1822 = vsub.f32 %v1184, %v1821
    %v1823 = vand.u32 %v1822, 4294901760
    %v1824 = vsub.f32 %v1822, %v1823
    %v1825 = vand.u32 %v1824, 4294901760
    %1826 = vmatmul.mubr.f32.gmra.mxu0 %v1825
    %v1827 = vpop.f32.mrf.mxu0
    %v1828 = vadd.f32 0.0, %v1827
    %v1829 = vpop.f32.mrf.mxu0
    %1830 = vmatprep.mubr.f32.mxu0 0.0
    %v1831 = vand.u32 %v1179, 4294901760
    %v1832 = vsub.f32 %v1179, %v1831
    %v1833 = vand.u32 %v1832, 4294901760
    %v1834 = vsub.f32 %v1832, %v1833
    %v1835 = vand.u32 %v1834, 4294901760
    %1836 = vmatmul.mubr.f32.gmra.mxu0 %v1835
    %v1837 = vpop.f32.mrf.mxu0
    %v1838 = vadd.f32 0.0, %v1837
    %v1839 = vpop.f32.mrf.mxu0
    %1840 = vmatprep.mubr.f32.mxu0 0.0
    %v1841 = vand.u32 %v1186, 4294901760
    %v1842 = vsub.f32 %v1186, %v1841
    %v1843 = vand.u32 %v1842, 4294901760
    %v1844 = vsub.f32 %v1842, %v1843
    %v1845 = vand.u32 %v1844, 4294901760
    %1846 = vmatmul.mubr.f32.gmra.mxu0 %v1845
    %v1847 = vpop.f32.mrf.mxu0
    %v1848 = vadd.f32 0.0, %v1847
    %v1849 = vpop.f32.mrf.mxu0
    %1850 = vmatprep.mubr.f32.mxu0 0.0
    %v1851 = vand.u32 %v1681, 4294901760
    %v1852 = vsub.f32 %v1681, %v1851
    %v1853 = vand.u32 %v1852, 4294901760
    %v1854 = vsub.f32 %v1852, %v1853
    %v1855 = vand.u32 %v1854, 4294901760
    %1856 = vmatmul.mubr.f32.gmra.mxu0 %v1855
    %v1857 = vpop.f32.mrf.mxu0
    %v1858 = vadd.f32 0.0, %v1857
    %v1859 = vpop.f32.mrf.mxu0
    %1860 = vmatprep.mubr.f32.mxu0 0.0
    %v1861 = vand.u32 %v1687, 4294901760
    %v1862 = vsub.f32 %v1687, %v1861
    %v1863 = vand.u32 %v1862, 4294901760
    %v1864 = vsub.f32 %v1862, %v1863
    %v1865 = vand.u32 %v1864, 4294901760
    %1866 = vmatmul.mubr.f32.gmra.mxu0 %v1865
    %v1867 = vpop.f32.mrf.mxu0
    %v1868 = vadd.f32 0.0, %v1867
    %v1869 = vpop.f32.mrf.mxu0
    %1870 = vdwg.mxu0
    %1871 = vmatprep.subr.mxu0 0.0
    %v1872 = vand.u32 %v94, 4294901760
    %v1873 = vsub.f32 %v94, %v1872
    %v1874 = vand.u32 %v1873, 4294901760
    %v1875 = vsub.f32 %v1873, %v1874
    %v1876 = vand.u32 %v1875, 4294901760
    %1877 = vmatpush1.msra.mxu0 %v1876
    %1878 = vmatprep.subr.mxu0 0.0
    %v1879 = vand.u32 %v93, 4294901760
    %v1880 = vsub.f32 %v93, %v1879
    %v1881 = vand.u32 %v1880, 4294901760
    %v1882 = vsub.f32 %v1880, %v1881
    %v1883 = vand.u32 %v1882, 4294901760
    %1884 = vmatpush1.msra.mxu0 %v1883
    %1885 = vmatprep.subr.mxu0 0.0
    %v1886 = vand.u32 %v92, 4294901760
    %v1887 = vsub.f32 %v92, %v1886
    %v1888 = vand.u32 %v1887, 4294901760
    %v1889 = vsub.f32 %v1887, %v1888
    %v1890 = vand.u32 %v1889, 4294901760
    %1891 = vmatpush1.msra.mxu0 %v1890
    %1892 = vmatprep.subr.mxu0 0.0
    %v1893 = vand.u32 %v91, 4294901760
    %v1894 = vsub.f32 %v91, %v1893
    %v1895 = vand.u32 %v1894, 4294901760
    %v1896 = vsub.f32 %v1894, %v1895
    %v1897 = vand.u32 %v1896, 4294901760
    %1898 = vmatpush1.msra.mxu0 %v1897
    %1899 = vmatprep.subr.mxu0 0.0
    %v1900 = vand.u32 %v90, 4294901760
    %v1901 = vsub.f32 %v90, %v1900
    %v1902 = vand.u32 %v1901, 4294901760
    %v1903 = vsub.f32 %v1901, %v1902
    %v1904 = vand.u32 %v1903, 4294901760
    %1905 = vmatpush1.msra.mxu0 %v1904
    %1906 = vmatprep.subr.mxu0 0.0
    %v1907 = vand.u32 %v89, 4294901760
    %v1908 = vsub.f32 %v89, %v1907
    %v1909 = vand.u32 %v1908, 4294901760
    %v1910 = vsub.f32 %v1908, %v1909
    %v1911 = vand.u32 %v1910, 4294901760
    %1912 = vmatpush1.msra.mxu0 %v1911
    %1913 = vmatprep.subr.mxu0 0.0
    %v1914 = vand.u32 %v88, 4294901760
    %v1915 = vsub.f32 %v88, %v1914
    %v1916 = vand.u32 %v1915, 4294901760
    %v1917 = vsub.f32 %v1915, %v1916
    %v1918 = vand.u32 %v1917, 4294901760
    %1919 = vmatpush1.msra.mxu0 %v1918
    %1920 = vmatprep.subr.mxu0 0.0
    %v1921 = vand.u32 %v87, 4294901760
    %v1922 = vsub.f32 %v87, %v1921
    %v1923 = vand.u32 %v1922, 4294901760
    %v1924 = vsub.f32 %v1922, %v1923
    %v1925 = vand.u32 %v1924, 4294901760
    %1926 = vmatpush1.msra.mxu0 %v1925
    %1927 = vmatprep.subr.mxu0 0.0
    %v1928 = vand.u32 %v86, 4294901760
    %v1929 = vsub.f32 %v86, %v1928
    %v1930 = vand.u32 %v1929, 4294901760
    %v1931 = vsub.f32 %v1929, %v1930
    %v1932 = vand.u32 %v1931, 4294901760
    %1933 = vmatpush1.msra.mxu0 %v1932
    %1934 = vmatprep.subr.mxu0 0.0
    %v1935 = vand.u32 %v85, 4294901760
    %v1936 = vsub.f32 %v85, %v1935
    %v1937 = vand.u32 %v1936, 4294901760
    %v1938 = vsub.f32 %v1936, %v1937
    %v1939 = vand.u32 %v1938, 4294901760
    %1940 = vmatpush1.msra.mxu0 %v1939
    %1941 = vmatprep.subr.mxu0 0.0
    %v1942 = vand.u32 %v84, 4294901760
    %v1943 = vsub.f32 %v84, %v1942
    %v1944 = vand.u32 %v1943, 4294901760
    %v1945 = vsub.f32 %v1943, %v1944
    %v1946 = vand.u32 %v1945, 4294901760
    %1947 = vmatpush1.msra.mxu0 %v1946
    %1948 = vmatprep.subr.mxu0 0.0
    %v1949 = vand.u32 %v83, 4294901760
    %v1950 = vsub.f32 %v83, %v1949
    %v1951 = vand.u32 %v1950, 4294901760
    %v1952 = vsub.f32 %v1950, %v1951
    %v1953 = vand.u32 %v1952, 4294901760
    %1954 = vmatpush1.msra.mxu0 %v1953
    %1955 = vmatprep.subr.mxu0 0.0
    %v1956 = vand.u32 %v82, 4294901760
    %v1957 = vsub.f32 %v82, %v1956
    %v1958 = vand.u32 %v1957, 4294901760
    %v1959 = vsub.f32 %v1957, %v1958
    %v1960 = vand.u32 %v1959, 4294901760
    %1961 = vmatpush1.msra.mxu0 %v1960
    %1962 = vmatprep.subr.mxu0 0.0
    %v1963 = vand.u32 %v81, 4294901760
    %v1964 = vsub.f32 %v81, %v1963
    %v1965 = vand.u32 %v1964, 4294901760
    %v1966 = vsub.f32 %v1964, %v1965
    %v1967 = vand.u32 %v1966, 4294901760
    %1968 = vmatpush1.msra.mxu0 %v1967
    %1969 = vmatprep.subr.mxu0 0.0
    %v1970 = vand.u32 %v80, 4294901760
    %v1971 = vsub.f32 %v80, %v1970
    %v1972 = vand.u32 %v1971, 4294901760
    %v1973 = vsub.f32 %v1971, %v1972
    %v1974 = vand.u32 %v1973, 4294901760
    %1975 = vmatpush1.msra.mxu0 %v1974
    %1976 = vmatprep.subr.mxu0 0.0
    %v1977 = vand.u32 %v79, 4294901760
    %v1978 = vsub.f32 %v79, %v1977
    %v1979 = vand.u32 %v1978, 4294901760
    %v1980 = vsub.f32 %v1978, %v1979
    %v1981 = vand.u32 %v1980, 4294901760
    %1982 = vmatpush1.msra.mxu0 %v1981
    %1983 = vmatprep.subr.mxu0 0.0
    %1984 = vmatpush2.msra.mxu0 0.0
    %1985 = vmatprep.subr.mxu0 0.0
    %1986 = vmatpush2.msra.mxu0 0.0
    %1987 = vmatprep.subr.mxu0 0.0
    %1988 = vmatpush2.msra.mxu0 0.0
    %1989 = vmatprep.subr.mxu0 0.0
    %1990 = vmatpush2.msra.mxu0 0.0
    %1991 = vmatprep.subr.mxu0 0.0
    %1992 = vmatpush2.msra.mxu0 0.0
    %1993 = vmatprep.subr.mxu0 0.0
    %1994 = vmatpush2.msra.mxu0 0.0
    %1995 = vmatprep.subr.mxu0 0.0
    %1996 = vmatpush2.msra.mxu0 0.0
    %1997 = vmatprep.subr.mxu0 0.0
    %1998 = vmatpush2.msra.mxu0 0.0
    %1999 = vmatprep.subr.mxu0 0.0
    %2000 = vmatpush2.msra.mxu0 0.0
    %2001 = vmatprep.subr.mxu0 0.0
    %2002 = vmatpush2.msra.mxu0 0.0
    %2003 = vmatprep.subr.mxu0 0.0
    %2004 = vmatpush2.msra.mxu0 0.0
    %2005 = vmatprep.subr.mxu0 0.0
    %2006 = vmatpush2.msra.mxu0 0.0
    %2007 = vmatprep.subr.mxu0 0.0
    %2008 = vmatpush2.msra.mxu0 0.0
    %2009 = vmatprep.subr.mxu0 0.0
    %2010 = vmatpush2.msra.mxu0 0.0
    %2011 = vmatprep.subr.mxu0 0.0
    %2012 = vmatpush2.msra.mxu0 0.0
    %2013 = vmatprep.subr.mxu0 0.0
    %2014 = vmatpush2.msra.mxu0 0.0
    %2015 = vmatprep.mubr.f32.mxu0 0.0
    %v2016 = vand.u32 %v637, 4294901760
    %2017 = vmatmul.mubr.f32.gmra.mxu0 %v2016
    %v2018 = vpop.f32.mrf.mxu0
    %v2019 = vadd.f32 %v1778, %v2018
    %v2020 = vpop.f32.mrf.mxu0
    %2021 = vmatprep.mubr.f32.mxu0 0.0
    %v2022 = vand.u32 %v644, 4294901760
    %2023 = vmatmul.mubr.f32.gmra.mxu0 %v2022
    %v2024 = vpop.f32.mrf.mxu0
    %v2025 = vadd.f32 %v1788, %v2024
    %v2026 = vpop.f32.mrf.mxu0
    %2027 = vmatprep.mubr.f32.mxu0 0.0
    %v2028 = vand.u32 %v639, 4294901760
    %2029 = vmatmul.mubr.f32.gmra.mxu0 %v2028
    %v2030 = vpop.f32.mrf.mxu0
    %v2031 = vadd.f32 %v1798, %v2030
    %v2032 = vpop.f32.mrf.mxu0
    %2033 = vmatprep.mubr.f32.mxu0 0.0
    %v2034 = vand.u32 %v646, 4294901760
    %2035 = vmatmul.mubr.f32.gmra.mxu0 %v2034
    %v2036 = vpop.f32.mrf.mxu0
    %v2037 = vadd.f32 %v1808, %v2036
    %v2038 = vpop.f32.mrf.mxu0
    %2039 = vmatprep.mubr.f32.mxu0 0.0
    %v2040 = vand.u32 %v1177, 4294901760
    %2041 = vmatmul.mubr.f32.gmra.mxu0 %v2040
    %v2042 = vpop.f32.mrf.mxu0
    %v2043 = vadd.f32 %v1818, %v2042
    %v2044 = vpop.f32.mrf.mxu0
    %2045 = vmatprep.mubr.f32.mxu0 0.0
    %v2046 = vand.u32 %v1184, 4294901760
    %2047 = vmatmul.mubr.f32.gmra.mxu0 %v2046
    %v2048 = vpop.f32.mrf.mxu0
    %v2049 = vadd.f32 %v1828, %v2048
    %v2050 = vpop.f32.mrf.mxu0
    %2051 = vmatprep.mubr.f32.mxu0 0.0
    %v2052 = vand.u32 %v1179, 4294901760
    %2053 = vmatmul.mubr.f32.gmra.mxu0 %v2052
    %v2054 = vpop.f32.mrf.mxu0
    %v2055 = vadd.f32 %v1838, %v2054
    %v2056 = vpop.f32.mrf.mxu0
    %2057 = vmatprep.mubr.f32.mxu0 0.0
    %v2058 = vand.u32 %v1186, 4294901760
    %2059 = vmatmul.mubr.f32.gmra.mxu0 %v2058
    %v2060 = vpop.f32.mrf.mxu0
    %v2061 = vadd.f32 %v1848, %v2060
    %v2062 = vpop.f32.mrf.mxu0
    %2063 = vmatprep.mubr.f32.mxu0 0.0
    %v2064 = vand.u32 %v1681, 4294901760
    %2065 = vmatmul.mubr.f32.gmra.mxu0 %v2064
    %v2066 = vpop.f32.mrf.mxu0
    %v2067 = vadd.f32 %v1858, %v2066
    %v2068 = vpop.f32.mrf.mxu0
    %2069 = vmatprep.mubr.f32.mxu0 0.0
    %v2070 = vand.u32 %v1687, 4294901760
    %2071 = vmatmul.mubr.f32.gmra.mxu0 %v2070
    %v2072 = vpop.f32.mrf.mxu0
    %v2073 = vadd.f32 %v1868, %v2072
    %v2074 = vpop.f32.mrf.mxu0
    %2075 = vdwg.mxu0
    %2076 = vmatprep.subr.mxu0 0.0
    %v2077 = vand.u32 %v94, 4294901760
    %v2078 = vsub.f32 %v94, %v2077
    %2079 = vmatpush1.msra.mxu0 %v2078
    %2080 = vmatprep.subr.mxu0 0.0
    %v2081 = vand.u32 %v93, 4294901760
    %v2082 = vsub.f32 %v93, %v2081
    %2083 = vmatpush1.msra.mxu0 %v2082
    %2084 = vmatprep.subr.mxu0 0.0
    %v2085 = vand.u32 %v92, 4294901760
    %v2086 = vsub.f32 %v92, %v2085
    %2087 = vmatpush1.msra.mxu0 %v2086
    %2088 = vmatprep.subr.mxu0 0.0
    %v2089 = vand.u32 %v91, 4294901760
    %v2090 = vsub.f32 %v91, %v2089
    %2091 = vmatpush1.msra.mxu0 %v2090
    %2092 = vmatprep.subr.mxu0 0.0
    %v2093 = vand.u32 %v90, 4294901760
    %v2094 = vsub.f32 %v90, %v2093
    %2095 = vmatpush1.msra.mxu0 %v2094
    %2096 = vmatprep.subr.mxu0 0.0
    %v2097 = vand.u32 %v89, 4294901760
    %v2098 = vsub.f32 %v89, %v2097
    %2099 = vmatpush1.msra.mxu0 %v2098
    %2100 = vmatprep.subr.mxu0 0.0
    %v2101 = vand.u32 %v88, 4294901760
    %v2102 = vsub.f32 %v88, %v2101
    %2103 = vmatpush1.msra.mxu0 %v2102
    %2104 = vmatprep.subr.mxu0 0.0
    %v2105 = vand.u32 %v87, 4294901760
    %v2106 = vsub.f32 %v87, %v2105
    %2107 = vmatpush1.msra.mxu0 %v2106
    %2108 = vmatprep.subr.mxu0 0.0
    %v2109 = vand.u32 %v86, 4294901760
    %v2110 = vsub.f32 %v86, %v2109
    %2111 = vmatpush1.msra.mxu0 %v2110
    %2112 = vmatprep.subr.mxu0 0.0
    %v2113 = vand.u32 %v85, 4294901760
    %v2114 = vsub.f32 %v85, %v2113
    %2115 = vmatpush1.msra.mxu0 %v2114
    %2116 = vmatprep.subr.mxu0 0.0
    %v2117 = vand.u32 %v84, 4294901760
    %v2118 = vsub.f32 %v84, %v2117
    %2119 = vmatpush1.msra.mxu0 %v2118
    %2120 = vmatprep.subr.mxu0 0.0
    %v2121 = vand.u32 %v83, 4294901760
    %v2122 = vsub.f32 %v83, %v2121
    %2123 = vmatpush1.msra.mxu0 %v2122
    %2124 = vmatprep.subr.mxu0 0.0
    %v2125 = vand.u32 %v82, 4294901760
    %v2126 = vsub.f32 %v82, %v2125
    %2127 = vmatpush1.msra.mxu0 %v2126
    %2128 = vmatprep.subr.mxu0 0.0
    %v2129 = vand.u32 %v81, 4294901760
    %v2130 = vsub.f32 %v81, %v2129
    %2131 = vmatpush1.msra.mxu0 %v2130
    %2132 = vmatprep.subr.mxu0 0.0
    %v2133 = vand.u32 %v80, 4294901760
    %v2134 = vsub.f32 %v80, %v2133
    %2135 = vmatpush1.msra.mxu0 %v2134
    %2136 = vmatprep.subr.mxu0 0.0
    %v2137 = vand.u32 %v79, 4294901760
    %v2138 = vsub.f32 %v79, %v2137
    %2139 = vmatpush1.msra.mxu0 %v2138
    %2140 = vmatprep.subr.mxu0 0.0
    %2141 = vmatpush2.msra.mxu0 0.0
    %2142 = vmatprep.subr.mxu0 0.0
    %2143 = vmatpush2.msra.mxu0 0.0
    %2144 = vmatprep.subr.mxu0 0.0
    %2145 = vmatpush2.msra.mxu0 0.0
    %2146 = vmatprep.subr.mxu0 0.0
    %2147 = vmatpush2.msra.mxu0 0.0
    %2148 = vmatprep.subr.mxu0 0.0
    %2149 = vmatpush2.msra.mxu0 0.0
    %2150 = vmatprep.subr.mxu0 0.0
    %2151 = vmatpush2.msra.mxu0 0.0
    %2152 = vmatprep.subr.mxu0 0.0
    %2153 = vmatpush2.msra.mxu0 0.0
    %2154 = vmatprep.subr.mxu0 0.0
    %2155 = vmatpush2.msra.mxu0 0.0
    %2156 = vmatprep.subr.mxu0 0.0
    %2157 = vmatpush2.msra.mxu0 0.0
    %2158 = vmatprep.subr.mxu0 0.0
    %2159 = vmatpush2.msra.mxu0 0.0
    %2160 = vmatprep.subr.mxu0 0.0
    %2161 = vmatpush2.msra.mxu0 0.0
    %2162 = vmatprep.subr.mxu0 0.0
    %2163 = vmatpush2.msra.mxu0 0.0
    %2164 = vmatprep.subr.mxu0 0.0
    %2165 = vmatpush2.msra.mxu0 0.0
    %2166 = vmatprep.subr.mxu0 0.0
    %2167 = vmatpush2.msra.mxu0 0.0
    %2168 = vmatprep.subr.mxu0 0.0
    %2169 = vmatpush2.msra.mxu0 0.0
    %2170 = vmatprep.subr.mxu0 0.0
    %2171 = vmatpush2.msra.mxu0 0.0
    %2172 = vmatprep.mubr.f32.mxu0 0.0
    %v2173 = vand.u32 %v637, 4294901760
    %v2174 = vsub.f32 %v637, %v2173
    %2175 = vmatmul.mubr.f32.gmra.mxu0 %v2174
    %v2176 = vpop.f32.mrf.mxu0
    %v2177 = vadd.f32 %v2019, %v2176
    %v2178 = vpop.f32.mrf.mxu0
    %2179 = vmatprep.mubr.f32.mxu0 0.0
    %v2180 = vand.u32 %v644, 4294901760
    %v2181 = vsub.f32 %v644, %v2180
    %2182 = vmatmul.mubr.f32.gmra.mxu0 %v2181
    %v2183 = vpop.f32.mrf.mxu0
    %v2184 = vadd.f32 %v2025, %v2183
    %v2185 = vpop.f32.mrf.mxu0
    %2186 = vmatprep.mubr.f32.mxu0 0.0
    %v2187 = vand.u32 %v639, 4294901760
    %v2188 = vsub.f32 %v639, %v2187
    %2189 = vmatmul.mubr.f32.gmra.mxu0 %v2188
    %v2190 = vpop.f32.mrf.mxu0
    %v2191 = vadd.f32 %v2031, %v2190
    %v2192 = vpop.f32.mrf.mxu0
    %2193 = vmatprep.mubr.f32.mxu0 0.0
    %v2194 = vand.u32 %v646, 4294901760
    %v2195 = vsub.f32 %v646, %v2194
    %2196 = vmatmul.mubr.f32.gmra.mxu0 %v2195
    %v2197 = vpop.f32.mrf.mxu0
    %v2198 = vadd.f32 %v2037, %v2197
    %v2199 = vpop.f32.mrf.mxu0
    %2200 = vmatprep.mubr.f32.mxu0 0.0
    %v2201 = vand.u32 %v1177, 4294901760
    %v2202 = vsub.f32 %v1177, %v2201
    %2203 = vmatmul.mubr.f32.gmra.mxu0 %v2202
    %v2204 = vpop.f32.mrf.mxu0
    %v2205 = vadd.f32 %v2043, %v2204
    %v2206 = vpop.f32.mrf.mxu0
    %2207 = vmatprep.mubr.f32.mxu0 0.0
    %v2208 = vand.u32 %v1184, 4294901760
    %v2209 = vsub.f32 %v1184, %v2208
    %2210 = vmatmul.mubr.f32.gmra.mxu0 %v2209
    %v2211 = vpop.f32.mrf.mxu0
    %v2212 = vadd.f32 %v2049, %v2211
    %v2213 = vpop.f32.mrf.mxu0
    %2214 = vmatprep.mubr.f32.mxu0 0.0
    %v2215 = vand.u32 %v1179, 4294901760
    %v2216 = vsub.f32 %v1179, %v2215
    %2217 = vmatmul.mubr.f32.gmra.mxu0 %v2216
    %v2218 = vpop.f32.mrf.mxu0
    %v2219 = vadd.f32 %v2055, %v2218
    %v2220 = vpop.f32.mrf.mxu0
    %2221 = vmatprep.mubr.f32.mxu0 0.0
    %v2222 = vand.u32 %v1186, 4294901760
    %v2223 = vsub.f32 %v1186, %v2222
    %2224 = vmatmul.mubr.f32.gmra.mxu0 %v2223
    %v2225 = vpop.f32.mrf.mxu0
    %v2226 = vadd.f32 %v2061, %v2225
    %v2227 = vpop.f32.mrf.mxu0
    %2228 = vmatprep.mubr.f32.mxu0 0.0
    %v2229 = vand.u32 %v1681, 4294901760
    %v2230 = vsub.f32 %v1681, %v2229
    %2231 = vmatmul.mubr.f32.gmra.mxu0 %v2230
    %v2232 = vpop.f32.mrf.mxu0
    %v2233 = vadd.f32 %v2067, %v2232
    %v2234 = vpop.f32.mrf.mxu0
    %2235 = vmatprep.mubr.f32.mxu0 0.0
    %v2236 = vand.u32 %v1687, 4294901760
    %v2237 = vsub.f32 %v1687, %v2236
    %2238 = vmatmul.mubr.f32.gmra.mxu0 %v2237
    %v2239 = vpop.f32.mrf.mxu0
    %v2240 = vadd.f32 %v2073, %v2239
    %v2241 = vpop.f32.mrf.mxu0
    %2242 = vdwg.mxu0
    %2243 = vmatprep.subr.mxu0 0.0
    %v2244 = vand.u32 %v94, 4294901760
    %2245 = vmatpush1.msra.mxu0 %v2244
    %2246 = vmatprep.subr.mxu0 0.0
    %v2247 = vand.u32 %v93, 4294901760
    %2248 = vmatpush1.msra.mxu0 %v2247
    %2249 = vmatprep.subr.mxu0 0.0
    %v2250 = vand.u32 %v92, 4294901760
    %2251 = vmatpush1.msra.mxu0 %v2250
    %2252 = vmatprep.subr.mxu0 0.0
    %v2253 = vand.u32 %v91, 4294901760
    %2254 = vmatpush1.msra.mxu0 %v2253
    %2255 = vmatprep.subr.mxu0 0.0
    %v2256 = vand.u32 %v90, 4294901760
    %2257 = vmatpush1.msra.mxu0 %v2256
    %2258 = vmatprep.subr.mxu0 0.0
    %v2259 = vand.u32 %v89, 4294901760
    %2260 = vmatpush1.msra.mxu0 %v2259
    %2261 = vmatprep.subr.mxu0 0.0
    %v2262 = vand.u32 %v88, 4294901760
    %2263 = vmatpush1.msra.mxu0 %v2262
    %2264 = vmatprep.subr.mxu0 0.0
    %v2265 = vand.u32 %v87, 4294901760
    %2266 = vmatpush1.msra.mxu0 %v2265
    %2267 = vmatprep.subr.mxu0 0.0
    %v2268 = vand.u32 %v86, 4294901760
    %2269 = vmatpush1.msra.mxu0 %v2268
    %2270 = vmatprep.subr.mxu0 0.0
    %v2271 = vand.u32 %v85, 4294901760
    %2272 = vmatpush1.msra.mxu0 %v2271
    %2273 = vmatprep.subr.mxu0 0.0
    %v2274 = vand.u32 %v84, 4294901760
    %2275 = vmatpush1.msra.mxu0 %v2274
    %2276 = vmatprep.subr.mxu0 0.0
    %v2277 = vand.u32 %v83, 4294901760
    %2278 = vmatpush1.msra.mxu0 %v2277
    %2279 = vmatprep.subr.mxu0 0.0
    %v2280 = vand.u32 %v82, 4294901760
    %2281 = vmatpush1.msra.mxu0 %v2280
    %2282 = vmatprep.subr.mxu0 0.0
    %v2283 = vand.u32 %v81, 4294901760
    %2284 = vmatpush1.msra.mxu0 %v2283
    %2285 = vmatprep.subr.mxu0 0.0
    %v2286 = vand.u32 %v80, 4294901760
    %2287 = vmatpush1.msra.mxu0 %v2286
    %2288 = vmatprep.subr.mxu0 0.0
    %v2289 = vand.u32 %v79, 4294901760
    %2290 = vmatpush1.msra.mxu0 %v2289
    %2291 = vmatprep.subr.mxu0 0.0
    %2292 = vmatpush2.msra.mxu0 0.0
    %2293 = vmatprep.subr.mxu0 0.0
    %2294 = vmatpush2.msra.mxu0 0.0
    %2295 = vmatprep.subr.mxu0 0.0
    %2296 = vmatpush2.msra.mxu0 0.0
    %2297 = vmatprep.subr.mxu0 0.0
    %2298 = vmatpush2.msra.mxu0 0.0
    %2299 = vmatprep.subr.mxu0 0.0
    %2300 = vmatpush2.msra.mxu0 0.0
    %2301 = vmatprep.subr.mxu0 0.0
    %2302 = vmatpush2.msra.mxu0 0.0
    %2303 = vmatprep.subr.mxu0 0.0
    %2304 = vmatpush2.msra.mxu0 0.0
    %2305 = vmatprep.subr.mxu0 0.0
    %2306 = vmatpush2.msra.mxu0 0.0
    %2307 = vmatprep.subr.mxu0 0.0
    %2308 = vmatpush2.msra.mxu0 0.0
    %2309 = vmatprep.subr.mxu0 0.0
    %2310 = vmatpush2.msra.mxu0 0.0
    %2311 = vmatprep.subr.mxu0 0.0
    %2312 = vmatpush2.msra.mxu0 0.0
    %2313 = vmatprep.subr.mxu0 0.0
    %2314 = vmatpush2.msra.mxu0 0.0
    %2315 = vmatprep.subr.mxu0 0.0
    %2316 = vmatpush2.msra.mxu0 0.0
    %2317 = vmatprep.subr.mxu0 0.0
    %2318 = vmatpush2.msra.mxu0 0.0
    %2319 = vmatprep.subr.mxu0 0.0
    %2320 = vmatpush2.msra.mxu0 0.0
    %2321 = vmatprep.subr.mxu0 0.0
    %2322 = vmatpush2.msra.mxu0 0.0
    %2323 = vmatprep.mubr.f32.mxu0 0.0
    %v2324 = vand.u32 %v637, 4294901760
    %v2325 = vsub.f32 %v637, %v2324
    %v2326 = vand.u32 %v2325, 4294901760
    %2327 = vmatmul.mubr.f32.gmra.mxu0 %v2326
    %v2328 = vpop.f32.mrf.mxu0
    %v2329 = vadd.f32 %v2177, %v2328
    %v2330 = vpop.f32.mrf.mxu0
    %2331 = vmatprep.mubr.f32.mxu0 0.0
    %v2332 = vand.u32 %v644, 4294901760
    %v2333 = vsub.f32 %v644, %v2332
    %v2334 = vand.u32 %v2333, 4294901760
    %2335 = vmatmul.mubr.f32.gmra.mxu0 %v2334
    %v2336 = vpop.f32.mrf.mxu0
    %v2337 = vadd.f32 %v2184, %v2336
    %v2338 = vpop.f32.mrf.mxu0
    %2339 = vmatprep.mubr.f32.mxu0 0.0
    %v2340 = vand.u32 %v639, 4294901760
    %v2341 = vsub.f32 %v639, %v2340
    %v2342 = vand.u32 %v2341, 4294901760
    %2343 = vmatmul.mubr.f32.gmra.mxu0 %v2342
    %v2344 = vpop.f32.mrf.mxu0
    %v2345 = vadd.f32 %v2191, %v2344
    %v2346 = vpop.f32.mrf.mxu0
    %2347 = vmatprep.mubr.f32.mxu0 0.0
    %v2348 = vand.u32 %v646, 4294901760
    %v2349 = vsub.f32 %v646, %v2348
    %v2350 = vand.u32 %v2349, 4294901760
    %2351 = vmatmul.mubr.f32.gmra.mxu0 %v2350
    %v2352 = vpop.f32.mrf.mxu0
    %v2353 = vadd.f32 %v2198, %v2352
    %v2354 = vpop.f32.mrf.mxu0
    %2355 = vmatprep.mubr.f32.mxu0 0.0
    %v2356 = vand.u32 %v1177, 4294901760
    %v2357 = vsub.f32 %v1177, %v2356
    %v2358 = vand.u32 %v2357, 4294901760
    %2359 = vmatmul.mubr.f32.gmra.mxu0 %v2358
    %v2360 = vpop.f32.mrf.mxu0
    %v2361 = vadd.f32 %v2205, %v2360
    %v2362 = vpop.f32.mrf.mxu0
    %2363 = vmatprep.mubr.f32.mxu0 0.0
    %v2364 = vand.u32 %v1184, 4294901760
    %v2365 = vsub.f32 %v1184, %v2364
    %v2366 = vand.u32 %v2365, 4294901760
    %2367 = vmatmul.mubr.f32.gmra.mxu0 %v2366
    %v2368 = vpop.f32.mrf.mxu0
    %v2369 = vadd.f32 %v2212, %v2368
    %v2370 = vpop.f32.mrf.mxu0
    %2371 = vmatprep.mubr.f32.mxu0 0.0
    %v2372 = vand.u32 %v1179, 4294901760
    %v2373 = vsub.f32 %v1179, %v2372
    %v2374 = vand.u32 %v2373, 4294901760
    %2375 = vmatmul.mubr.f32.gmra.mxu0 %v2374
    %v2376 = vpop.f32.mrf.mxu0
    %v2377 = vadd.f32 %v2219, %v2376
    %v2378 = vpop.f32.mrf.mxu0
    %2379 = vmatprep.mubr.f32.mxu0 0.0
    %v2380 = vand.u32 %v1186, 4294901760
    %v2381 = vsub.f32 %v1186, %v2380
    %v2382 = vand.u32 %v2381, 4294901760
    %2383 = vmatmul.mubr.f32.gmra.mxu0 %v2382
    %v2384 = vpop.f32.mrf.mxu0
    %v2385 = vadd.f32 %v2226, %v2384
    %v2386 = vpop.f32.mrf.mxu0
    %2387 = vmatprep.mubr.f32.mxu0 0.0
    %v2388 = vand.u32 %v1681, 4294901760
    %v2389 = vsub.f32 %v1681, %v2388
    %v2390 = vand.u32 %v2389, 4294901760
    %2391 = vmatmul.mubr.f32.gmra.mxu0 %v2390
    %v2392 = vpop.f32.mrf.mxu0
    %v2393 = vadd.f32 %v2233, %v2392
    %v2394 = vpop.f32.mrf.mxu0
    %2395 = vmatprep.mubr.f32.mxu0 0.0
    %v2396 = vand.u32 %v1687, 4294901760
    %v2397 = vsub.f32 %v1687, %v2396
    %v2398 = vand.u32 %v2397, 4294901760
    %2399 = vmatmul.mubr.f32.gmra.mxu0 %v2398
    %v2400 = vpop.f32.mrf.mxu0
    %v2401 = vadd.f32 %v2240, %v2400
    %v2402 = vpop.f32.mrf.mxu0
    %2403 = vdwg.mxu0
    %2404 = vmatprep.subr.mxu0 0.0
    %v2405 = vand.u32 %v94, 4294901760
    %v2406 = vsub.f32 %v94, %v2405
    %v2407 = vand.u32 %v2406, 4294901760
    %2408 = vmatpush1.msra.mxu0 %v2407
    %2409 = vmatprep.subr.mxu0 0.0
    %v2410 = vand.u32 %v93, 4294901760
    %v2411 = vsub.f32 %v93, %v2410
    %v2412 = vand.u32 %v2411, 4294901760
    %2413 = vmatpush1.msra.mxu0 %v2412
    %2414 = vmatprep.subr.mxu0 0.0
    %v2415 = vand.u32 %v92, 4294901760
    %v2416 = vsub.f32 %v92, %v2415
    %v2417 = vand.u32 %v2416, 4294901760
    %2418 = vmatpush1.msra.mxu0 %v2417
    %2419 = vmatprep.subr.mxu0 0.0
    %v2420 = vand.u32 %v91, 4294901760
    %v2421 = vsub.f32 %v91, %v2420
    %v2422 = vand.u32 %v2421, 4294901760
    %2423 = vmatpush1.msra.mxu0 %v2422
    %2424 = vmatprep.subr.mxu0 0.0
    %v2425 = vand.u32 %v90, 4294901760
    %v2426 = vsub.f32 %v90, %v2425
    %v2427 = vand.u32 %v2426, 4294901760
    %2428 = vmatpush1.msra.mxu0 %v2427
    %2429 = vmatprep.subr.mxu0 0.0
    %v2430 = vand.u32 %v89, 4294901760
    %v2431 = vsub.f32 %v89, %v2430
    %v2432 = vand.u32 %v2431, 4294901760
    %2433 = vmatpush1.msra.mxu0 %v2432
    %2434 = vmatprep.subr.mxu0 0.0
    %v2435 = vand.u32 %v88, 4294901760
    %v2436 = vsub.f32 %v88, %v2435
    %v2437 = vand.u32 %v2436, 4294901760
    %2438 = vmatpush1.msra.mxu0 %v2437
    %2439 = vmatprep.subr.mxu0 0.0
    %v2440 = vand.u32 %v87, 4294901760
    %v2441 = vsub.f32 %v87, %v2440
    %v2442 = vand.u32 %v2441, 4294901760
    %2443 = vmatpush1.msra.mxu0 %v2442
    %2444 = vmatprep.subr.mxu0 0.0
    %v2445 = vand.u32 %v86, 4294901760
    %v2446 = vsub.f32 %v86, %v2445
    %v2447 = vand.u32 %v2446, 4294901760
    %2448 = vmatpush1.msra.mxu0 %v2447
    %2449 = vmatprep.subr.mxu0 0.0
    %v2450 = vand.u32 %v85, 4294901760
    %v2451 = vsub.f32 %v85, %v2450
    %v2452 = vand.u32 %v2451, 4294901760
    %2453 = vmatpush1.msra.mxu0 %v2452
    %2454 = vmatprep.subr.mxu0 0.0
    %v2455 = vand.u32 %v84, 4294901760
    %v2456 = vsub.f32 %v84, %v2455
    %v2457 = vand.u32 %v2456, 4294901760
    %2458 = vmatpush1.msra.mxu0 %v2457
    %2459 = vmatprep.subr.mxu0 0.0
    %v2460 = vand.u32 %v83, 4294901760
    %v2461 = vsub.f32 %v83, %v2460
    %v2462 = vand.u32 %v2461, 4294901760
    %2463 = vmatpush1.msra.mxu0 %v2462
    %2464 = vmatprep.subr.mxu0 0.0
    %v2465 = vand.u32 %v82, 4294901760
    %v2466 = vsub.f32 %v82, %v2465
    %v2467 = vand.u32 %v2466, 4294901760
    %2468 = vmatpush1.msra.mxu0 %v2467
    %2469 = vmatprep.subr.mxu0 0.0
    %v2470 = vand.u32 %v81, 4294901760
    %v2471 = vsub.f32 %v81, %v2470
    %v2472 = vand.u32 %v2471, 4294901760
    %2473 = vmatpush1.msra.mxu0 %v2472
    %2474 = vmatprep.subr.mxu0 0.0
    %v2475 = vand.u32 %v80, 4294901760
    %v2476 = vsub.f32 %v80, %v2475
    %v2477 = vand.u32 %v2476, 4294901760
    %2478 = vmatpush1.msra.mxu0 %v2477
    %2479 = vmatprep.subr.mxu0 0.0
    %v2480 = vand.u32 %v79, 4294901760
    %v2481 = vsub.f32 %v79, %v2480
    %v2482 = vand.u32 %v2481, 4294901760
    %2483 = vmatpush1.msra.mxu0 %v2482
    %2484 = vmatprep.subr.mxu0 0.0
    %2485 = vmatpush2.msra.mxu0 0.0
    %2486 = vmatprep.subr.mxu0 0.0
    %2487 = vmatpush2.msra.mxu0 0.0
    %2488 = vmatprep.subr.mxu0 0.0
    %2489 = vmatpush2.msra.mxu0 0.0
    %2490 = vmatprep.subr.mxu0 0.0
    %2491 = vmatpush2.msra.mxu0 0.0
    %2492 = vmatprep.subr.mxu0 0.0
    %2493 = vmatpush2.msra.mxu0 0.0
    %2494 = vmatprep.subr.mxu0 0.0
    %2495 = vmatpush2.msra.mxu0 0.0
    %2496 = vmatprep.subr.mxu0 0.0
    %2497 = vmatpush2.msra.mxu0 0.0
    %2498 = vmatprep.subr.mxu0 0.0
    %2499 = vmatpush2.msra.mxu0 0.0
    %2500 = vmatprep.subr.mxu0 0.0
    %2501 = vmatpush2.msra.mxu0 0.0
    %2502 = vmatprep.subr.mxu0 0.0
    %2503 = vmatpush2.msra.mxu0 0.0
    %2504 = vmatprep.subr.mxu0 0.0
    %2505 = vmatpush2.msra.mxu0 0.0
    %2506 = vmatprep.subr.mxu0 0.0
    %2507 = vmatpush2.msra.mxu0 0.0
    %2508 = vmatprep.subr.mxu0 0.0
    %2509 = vmatpush2.msra.mxu0 0.0
    %2510 = vmatprep.subr.mxu0 0.0
    %2511 = vmatpush2.msra.mxu0 0.0
    %2512 = vmatprep.subr.mxu0 0.0
    %2513 = vmatpush2.msra.mxu0 0.0
    %2514 = vmatprep.subr.mxu0 0.0
    %2515 = vmatpush2.msra.mxu0 0.0
    %2516 = vmatprep.mubr.f32.mxu0 0.0
    %v2517 = vand.u32 %v637, 4294901760
    %2518 = vmatmul.mubr.f32.gmra.mxu0 %v2517
    %v2519 = vpop.f32.mrf.mxu0
    %v2520 = vadd.f32 %v2329, %v2519
    %v2521 = vpop.f32.mrf.mxu0
    %2522 = vmatprep.mubr.f32.mxu0 0.0
    %v2523 = vand.u32 %v644, 4294901760
    %2524 = vmatmul.mubr.f32.gmra.mxu0 %v2523
    %v2525 = vpop.f32.mrf.mxu0
    %v2526 = vadd.f32 %v2337, %v2525
    %v2527 = vpop.f32.mrf.mxu0
    %2528 = vmatprep.mubr.f32.mxu0 0.0
    %v2529 = vand.u32 %v639, 4294901760
    %2530 = vmatmul.mubr.f32.gmra.mxu0 %v2529
    %v2531 = vpop.f32.mrf.mxu0
    %v2532 = vadd.f32 %v2345, %v2531
    %v2533 = vpop.f32.mrf.mxu0
    %2534 = vmatprep.mubr.f32.mxu0 0.0
    %v2535 = vand.u32 %v646, 4294901760
    %2536 = vmatmul.mubr.f32.gmra.mxu0 %v2535
    %v2537 = vpop.f32.mrf.mxu0
    %v2538 = vadd.f32 %v2353, %v2537
    %v2539 = vpop.f32.mrf.mxu0
    %2540 = vmatprep.mubr.f32.mxu0 0.0
    %v2541 = vand.u32 %v1177, 4294901760
    %2542 = vmatmul.mubr.f32.gmra.mxu0 %v2541
    %v2543 = vpop.f32.mrf.mxu0
    %v2544 = vadd.f32 %v2361, %v2543
    %v2545 = vpop.f32.mrf.mxu0
    %2546 = vmatprep.mubr.f32.mxu0 0.0
    %v2547 = vand.u32 %v1184, 4294901760
    %2548 = vmatmul.mubr.f32.gmra.mxu0 %v2547
    %v2549 = vpop.f32.mrf.mxu0
    %v2550 = vadd.f32 %v2369, %v2549
    %v2551 = vpop.f32.mrf.mxu0
    %2552 = vmatprep.mubr.f32.mxu0 0.0
    %v2553 = vand.u32 %v1179, 4294901760
    %2554 = vmatmul.mubr.f32.gmra.mxu0 %v2553
    %v2555 = vpop.f32.mrf.mxu0
    %v2556 = vadd.f32 %v2377, %v2555
    %v2557 = vpop.f32.mrf.mxu0
    %2558 = vmatprep.mubr.f32.mxu0 0.0
    %v2559 = vand.u32 %v1186, 4294901760
    %2560 = vmatmul.mubr.f32.gmra.mxu0 %v2559
    %v2561 = vpop.f32.mrf.mxu0
    %v2562 = vadd.f32 %v2385, %v2561
    %v2563 = vpop.f32.mrf.mxu0
    %2564 = vmatprep.mubr.f32.mxu0 0.0
    %v2565 = vand.u32 %v1681, 4294901760
    %2566 = vmatmul.mubr.f32.gmra.mxu0 %v2565
    %v2567 = vpop.f32.mrf.mxu0
    %v2568 = vadd.f32 %v2393, %v2567
    %v2569 = vpop.f32.mrf.mxu0
    %2570 = vmatprep.mubr.f32.mxu0 0.0
    %v2571 = vand.u32 %v1687, 4294901760
    %2572 = vmatmul.mubr.f32.gmra.mxu0 %v2571
    %v2573 = vpop.f32.mrf.mxu0
    %v2574 = vadd.f32 %v2401, %v2573
    %v2575 = vpop.f32.mrf.mxu0
    %2576 = vdwg.mxu0
    %2577 = vmatprep.subr.mxu0 0.0
    %v2578 = vand.u32 %v94, 4294901760
    %2579 = vmatpush1.msra.mxu0 %v2578
    %2580 = vmatprep.subr.mxu0 0.0
    %v2581 = vand.u32 %v93, 4294901760
    %2582 = vmatpush1.msra.mxu0 %v2581
    %2583 = vmatprep.subr.mxu0 0.0
    %v2584 = vand.u32 %v92, 4294901760
    %2585 = vmatpush1.msra.mxu0 %v2584
    %2586 = vmatprep.subr.mxu0 0.0
    %v2587 = vand.u32 %v91, 4294901760
    %2588 = vmatpush1.msra.mxu0 %v2587
    %2589 = vmatprep.subr.mxu0 0.0
    %v2590 = vand.u32 %v90, 4294901760
    %2591 = vmatpush1.msra.mxu0 %v2590
    %2592 = vmatprep.subr.mxu0 0.0
    %v2593 = vand.u32 %v89, 4294901760
    %2594 = vmatpush1.msra.mxu0 %v2593
    %2595 = vmatprep.subr.mxu0 0.0
    %v2596 = vand.u32 %v88, 4294901760
    %2597 = vmatpush1.msra.mxu0 %v2596
    %2598 = vmatprep.subr.mxu0 0.0
    %v2599 = vand.u32 %v87, 4294901760
    %2600 = vmatpush1.msra.mxu0 %v2599
    %2601 = vmatprep.subr.mxu0 0.0
    %v2602 = vand.u32 %v86, 4294901760
    %2603 = vmatpush1.msra.mxu0 %v2602
    %2604 = vmatprep.subr.mxu0 0.0
    %v2605 = vand.u32 %v85, 4294901760
    %2606 = vmatpush1.msra.mxu0 %v2605
    %2607 = vmatprep.subr.mxu0 0.0
    %v2608 = vand.u32 %v84, 4294901760
    %2609 = vmatpush1.msra.mxu0 %v2608
    %2610 = vmatprep.subr.mxu0 0.0
    %v2611 = vand.u32 %v83, 4294901760
    %2612 = vmatpush1.msra.mxu0 %v2611
    %2613 = vmatprep.subr.mxu0 0.0
    %v2614 = vand.u32 %v82, 4294901760
    %2615 = vmatpush1.msra.mxu0 %v2614
    %2616 = vmatprep.subr.mxu0 0.0
    %v2617 = vand.u32 %v81, 4294901760
    %2618 = vmatpush1.msra.mxu0 %v2617
    %2619 = vmatprep.subr.mxu0 0.0
    %v2620 = vand.u32 %v80, 4294901760
    %2621 = vmatpush1.msra.mxu0 %v2620
    %2622 = vmatprep.subr.mxu0 0.0
    %v2623 = vand.u32 %v79, 4294901760
    %2624 = vmatpush1.msra.mxu0 %v2623
    %2625 = vmatprep.subr.mxu0 0.0
    %2626 = vmatpush2.msra.mxu0 0.0
    %2627 = vmatprep.subr.mxu0 0.0
    %2628 = vmatpush2.msra.mxu0 0.0
    %2629 = vmatprep.subr.mxu0 0.0
    %2630 = vmatpush2.msra.mxu0 0.0
    %2631 = vmatprep.subr.mxu0 0.0
    %2632 = vmatpush2.msra.mxu0 0.0
    %2633 = vmatprep.subr.mxu0 0.0
    %2634 = vmatpush2.msra.mxu0 0.0
    %2635 = vmatprep.subr.mxu0 0.0
    %2636 = vmatpush2.msra.mxu0 0.0
    %2637 = vmatprep.subr.mxu0 0.0
    %2638 = vmatpush2.msra.mxu0 0.0
    %2639 = vmatprep.subr.mxu0 0.0
    %2640 = vmatpush2.msra.mxu0 0.0
    %2641 = vmatprep.subr.mxu0 0.0
    %2642 = vmatpush2.msra.mxu0 0.0
    %2643 = vmatprep.subr.mxu0 0.0
    %2644 = vmatpush2.msra.mxu0 0.0
    %2645 = vmatprep.subr.mxu0 0.0
    %2646 = vmatpush2.msra.mxu0 0.0
    %2647 = vmatprep.subr.mxu0 0.0
    %2648 = vmatpush2.msra.mxu0 0.0
    %2649 = vmatprep.subr.mxu0 0.0
    %2650 = vmatpush2.msra.mxu0 0.0
    %2651 = vmatprep.subr.mxu0 0.0
    %2652 = vmatpush2.msra.mxu0 0.0
    %2653 = vmatprep.subr.mxu0 0.0
    %2654 = vmatpush2.msra.mxu0 0.0
    %2655 = vmatprep.subr.mxu0 0.0
    %2656 = vmatpush2.msra.mxu0 0.0
    %2657 = vmatprep.mubr.f32.mxu0 0.0
    %v2658 = vand.u32 %v637, 4294901760
    %2659 = vmatmul.mubr.f32.gmra.mxu0 %v2658
    %v2660 = vpop.f32.mrf.mxu0
    %v2661 = vadd.f32 %v2520, %v2660
    %v2662 = vpop.f32.mrf.mxu0
    %2663 = vmatprep.mubr.f32.mxu0 0.0
    %v2664 = vand.u32 %v644, 4294901760
    %2665 = vmatmul.mubr.f32.gmra.mxu0 %v2664
    %v2666 = vpop.f32.mrf.mxu0
    %v2667 = vadd.f32 %v2526, %v2666
    %v2668 = vpop.f32.mrf.mxu0
    %2669 = vmatprep.mubr.f32.mxu0 0.0
    %v2670 = vand.u32 %v639, 4294901760
    %2671 = vmatmul.mubr.f32.gmra.mxu0 %v2670
    %v2672 = vpop.f32.mrf.mxu0
    %v2673 = vadd.f32 %v2532, %v2672
    %v2674 = vpop.f32.mrf.mxu0
    %2675 = vmatprep.mubr.f32.mxu0 0.0
    %v2676 = vand.u32 %v646, 4294901760
    %2677 = vmatmul.mubr.f32.gmra.mxu0 %v2676
    %v2678 = vpop.f32.mrf.mxu0
    %v2679 = vadd.f32 %v2538, %v2678
    %v2680 = vpop.f32.mrf.mxu0
    %2681 = vmatprep.mubr.f32.mxu0 0.0
    %v2682 = vand.u32 %v1177, 4294901760
    %2683 = vmatmul.mubr.f32.gmra.mxu0 %v2682
    %v2684 = vpop.f32.mrf.mxu0
    %v2685 = vadd.f32 %v2544, %v2684
    %v2686 = vpop.f32.mrf.mxu0
    %2687 = vmatprep.mubr.f32.mxu0 0.0
    %v2688 = vand.u32 %v1184, 4294901760
    %2689 = vmatmul.mubr.f32.gmra.mxu0 %v2688
    %v2690 = vpop.f32.mrf.mxu0
    %v2691 = vadd.f32 %v2550, %v2690
    %v2692 = vpop.f32.mrf.mxu0
    %2693 = vmatprep.mubr.f32.mxu0 0.0
    %v2694 = vand.u32 %v1179, 4294901760
    %2695 = vmatmul.mubr.f32.gmra.mxu0 %v2694
    %v2696 = vpop.f32.mrf.mxu0
    %v2697 = vadd.f32 %v2556, %v2696
    %v2698 = vpop.f32.mrf.mxu0
    %2699 = vmatprep.mubr.f32.mxu0 0.0
    %v2700 = vand.u32 %v1186, 4294901760
    %2701 = vmatmul.mubr.f32.gmra.mxu0 %v2700
    %v2702 = vpop.f32.mrf.mxu0
    %v2703 = vadd.f32 %v2562, %v2702
    %v2704 = vpop.f32.mrf.mxu0
    %2705 = vmatprep.mubr.f32.mxu0 0.0
    %v2706 = vand.u32 %v1681, 4294901760
    %2707 = vmatmul.mubr.f32.gmra.mxu0 %v2706
    %v2708 = vpop.f32.mrf.mxu0
    %v2709 = vadd.f32 %v2568, %v2708
    %v2710 = vpop.f32.mrf.mxu0
    %2711 = vmatprep.mubr.f32.mxu0 0.0
    %v2712 = vand.u32 %v1687, 4294901760
    %2713 = vmatmul.mubr.f32.gmra.mxu0 %v2712
    %v2714 = vpop.f32.mrf.mxu0
    %v2715 = vadd.f32 %v2574, %v2714
    %v2716 = vpop.f32.mrf.mxu0
    %2717 = vdwg.mxu0
    %v2718 = vmul.f32 %v2661, %v2661
    %v2719 = vmul.f32 %v2667, %v2667
    %v2720 = vmul.f32 %v2673, %v2673
    %v2721 = vmul.f32 %v2679, %v2679
    %v2722 = vmul.f32 %v2661, %v2673
    %v2723 = vmul.f32 %v2667, %v2679
    %v2724 = vsub.f32 %v2685, %v2718
    %v2725 = vsub.f32 %v2691, %v2719
    %v2726 = vsub.f32 %v2697, %v2720
    %v2727 = vsub.f32 %v2703, %v2721
    %v2728 = vsub.f32 %v2709, %v2722
    %v2729 = vsub.f32 %v2715, %v2723
    %v2730 = vmul.f32 %v2722, 2.0
    %v2731 = vmul.f32 %v2723, 2.0
    %v2732 = vadd.f32 %v2730, 0.0001
    %v2733 = vadd.f32 %v2731, 0.0001
    %v2734 = vmul.f32 %v2728, 2.0
    %v2735 = vmul.f32 %v2729, 2.0
    %v2736 = vadd.f32 %v2734, 0.0009
    %v2737 = vadd.f32 %v2735, 0.0009
    %v2738 = vmul.f32 %v2732, %v2736
    %v2739 = vmul.f32 %v2733, %v2737
    %v2740 = vadd.f32 %v2718, %v2720
    %v2741 = vadd.f32 %v2719, %v2721
    %v2742 = vadd.f32 %v2740, 0.0001
    %v2743 = vadd.f32 %v2741, 0.0001
    %v2744 = vadd.f32 %v2724, %v2726
    %v2745 = vadd.f32 %v2725, %v2727
    %v2746 = vadd.f32 %v2744, 0.0009
    %v2747 = vadd.f32 %v2745, 0.0009
    %v2748 = vmul.f32 %v2742, %v2746
    %v2749 = vmul.f32 %v2743, %v2747
    %v2750 = vrcp.pop %v2748
    %v2751 = vmul.f32 %v2738, %v2750
    %v2752 = vrcp.pop %v2749
    %v2753 = vmul.f32 %v2739, %v2752
    %v2754 = vadd.f32 %v2751, %v2753
    %v2755 = vrot.slane %v2754, 4
    %v2756 = vadd.f32 %v2754, %v2755
    %v2757 = vrot.slane %v2756, 2
    %v2758 = vadd.f32 %v2756, %v2757
    %v2759 = vrot.slane %v2758, 1
    %v2760 = vadd.f32 %v2758, %v2759
    %2761 = vst [vmem:[#allocation10] sm:$0x1] %v2760
    // Predicated region
    $region34: #{tpu_custom_call.1} parent=1 // pred_check
      _
    $region35: #{tpu_custom_call.1} parent=1 // pred_check_branch
      %2763 = sbr.rel (0) target = $region37
    $region36: #{tpu_custom_call.1} parent=1 // pred_region
      %s2765 = ssub.s32 16, 16
      %2766 = vsyncadd [#allocation4], %s2765
      %s2768 = sshll.u32 [#allocation10], 4
      %s2769 = int_to_ptr.vmem [resolvable:$true] %s2768
      %2771 = dma.vmem_to_hbm [thread:$0]  %s2769, 16, %s4, [#allocation4]
    $region37: #{tpu_custom_call.1} parent=1 // pred_fallthru
      _
    // Predicated region
    $region38: #{tpu_custom_call.1} parent=1 // pred_check
      _
    $region39: #{tpu_custom_call.1} parent=1 // pred_check_branch
      %2773 = sbr.rel (0) target = $region41
    $region40: #{tpu_custom_call.1} parent=1 // pred_region
      %2774 = dma.done [#allocation4], 16
    $region41: #{tpu_custom_call.1} parent=1 // pred_fallthru
      _
    %2775 = vsyncpa [#allocation3], 1
    %2776 = vsyncpa [#allocation6], 1
    %2777 = vsyncpa [#allocation9], 1
    %2778 = vsyncpa [#allocation4], 1

</llo_original>
